<compile_context>
chip_gen: v7x
topology: tpu7x:2x2x1
jax: 0.10.0
libtpu: 0.0.40
codegen_flags: <defaults>
</compile_context>

<pallas_src>
import jax
import jax.numpy as jnp
from jax.experimental import pallas as pl
from jax.experimental.pallas import tpu as pltpu


# ----------------------------------------------------------------------------
# Fused kernel: whole (sub-)batch per grid step, everything in VMEM / vregs.
# ----------------------------------------------------------------------------
def _fused_block_kernel(x_ref, w1_ref, w23_ref, sh_ref, bn_ref, out_ref):
    """
    x_ref  : (M, W*Cin)           flat NHWC rows, M = images_per_step * H
    w1_ref : (W*Cin, 4*W*Cout)    conv1 Toeplitz slabs [dy0|dy1|dy2] + 1x1 shortcut
    w23_ref: (2, W*Cout, 3*W*Cout) conv2 / conv3 Toeplitz slabs [dy0|dy1|dy2]
    sh_ref : (2, M, M)            per-image block-diag row-shift mats [down, up]
    bn_ref : (8, W*Cout)          folded BN rows [s1,b1,s2,b2,s3,b3,ssc,bsc]
    out_ref: (M, W*Cout)          lane-dense output (W*Cout == 128 here)
    """
    n = out_ref.shape[-1]                       # W*Cout
    x = x_ref[...]                              # (M, W*Cin)
    s_dn = sh_ref[0]                            # picks row r-1 (0 across images)
    s_up = sh_ref[1]                            # picks row r+1 (0 across images)

    def bn(i):
        return bn_ref[i:i + 1, :]               # (1, n) static slice

    def taps(y):
        # y: (M, >=3n) with [dy=0 | dy=1 | dy=2] on lanes (128-aligned slices).
        # dy shift is applied on the matmul output with tiny MXU matmuls whose
        # block-diagonal structure also zeroes the per-image boundary rows.
        return (jnp.dot(s_dn, y[:, 0:n], preferred_element_type=jnp.float32)
                + y[:, n:2 * n]
                + jnp.dot(s_up, y[:, 2 * n:3 * n],
                          preferred_element_type=jnp.float32))

    def lrelu(v):
        return jnp.where(v >= 0, v, 0.1 * v)    # leaky_relu(0.1)

    # conv1 + bn1 + lrelu, with the 1x1 shortcut fused into the same matmul.
    y1 = jnp.dot(x, w1_ref[...], preferred_element_type=jnp.float32)  # (M, 4n)
    h = lrelu(taps(y1) * bn(0) + bn(1))
    sc = y1[:, 3 * n:4 * n] * bn(6) + bn(7)     # shortcut conv + bnsc

    # conv2 + bn2 + lrelu
    y2 = jnp.dot(h, w23_ref[0], preferred_element_type=jnp.float32)   # (M, 3n)
    h = lrelu(taps(y2) * bn(2) + bn(3))

    # conv3 + bn3 + residual add.  dropout == 0 in this block -> no-op.
    # TODO(synk): if dropout > 0 were needed, use pltpu.prng_seed/prng_random_bits.
    y3 = jnp.dot(h, w23_ref[1], preferred_element_type=jnp.float32)   # (M, 3n)
    out_ref[...] = (taps(y3) * bn(4) + bn(5) + sc).astype(out_ref.dtype)


# ----------------------------------------------------------------------------
# One-time parameter re-layout (kept OUT of the per-call forward path).
# ----------------------------------------------------------------------------
def _toeplitz_conv3x3(w_hwio, W):
    """(3,3,Cin,Cout) HWIO -> list of 3 (W*Cin, W*Cout) slabs (one per dy)."""
    _, _, cin, cout = w_hwio.shape
    mats = []
    for dy in range(3):
        big = jnp.zeros((W, cin, W, cout), jnp.float32)
        for dx in range(3):
            shift = jnp.eye(W, W, k=1 - dx, dtype=jnp.float32)
            big = big + jnp.einsum("ab,io->aibo", shift, w_hwio[dy, dx])
        mats.append(big.reshape(W * cin, W * cout))
    return mats


def _blockdiag_conv1x1(wsc_io, W):
    """(Cin, Cout) -> (W*Cin, W*Cout) block-diagonal (shared across w)."""
    cin, cout = wsc_io.shape
    eye = jnp.eye(W, dtype=jnp.float32)
    return jnp.einsum("ab,io->aibo", eye, wsc_io).reshape(W * cin, W * cout)


def _shift_mats(images_per_step, H):
    """Block-diagonal row-shift matrices: 'down' picks row r-1, 'up' picks r+1,
    with zeros across image boundaries (so boundary taps contribute nothing)."""
    eye_b = jnp.eye(images_per_step, dtype=jnp.float32)
    dn = jnp.einsum("ab,ij->aibj", eye_b, jnp.eye(H, k=-1, dtype=jnp.float32))
    up = jnp.einsum("ab,ij->aibj", eye_b, jnp.eye(H, k=1, dtype=jnp.float32))
    m = images_per_step * H
    return jnp.stack([dn.reshape(m, m), up.reshape(m, m)], axis=0)


def pack_params(params, H, W, images_per_step):
    t1 = _toeplitz_conv3x3(params["w1"], W)
    t2 = _toeplitz_conv3x3(params["w2"], W)
    t3 = _toeplitz_conv3x3(params["w3"], W)
    wsc = _blockdiag_conv1x1(params["wsc"], W)

    w1cat = jnp.concatenate(t1 + [wsc], axis=1)                 # (W*Cin, 4*W*Cout)
    w23 = jnp.stack([jnp.concatenate(t2, axis=1),
                     jnp.concatenate(t3, axis=1)], axis=0)      # (2, W*Cout, 3*W*Cout)

    rows = []
    for name in ("bn1", "bn2", "bn3", "bnsc"):
        s, b = params[name]
        rows.append(jnp.tile(s, W))
        rows.append(jnp.tile(b, W))
    bn = jnp.stack(rows, axis=0)                                # (8, W*Cout)

    shifts = _shift_mats(images_per_step, H)                    # (2, M, M)
    return {"w1cat": w1cat, "w23": w23, "bn": bn, "shifts": shifts}


# ----------------------------------------------------------------------------
# Forward wrapper (NCHW in / NCHW out, matching the PyTorch module).
# ----------------------------------------------------------------------------
def basic_block_rn12_forward(x_nchw, packed, images_per_step=None):
    x = jnp.transpose(x_nchw, (0, 2, 3, 1)).astype(jnp.float32)   # -> NHWC
    B, H, W, cin = x.shape
    n = packed["bn"].shape[-1]                                    # W*Cout
    bB = B if images_per_step is None else images_per_step
    assert B % bB == 0
    m = bB * H

    x_flat = x.reshape(B * H, W * cin)                            # flat rows
    w1cat, w23, shifts, bn = (packed["w1cat"], packed["w23"],
                              packed["shifts"], packed["bn"])

    out_flat = pl.pallas_call(
        _fused_block_kernel,
        out_shape=jax.ShapeDtypeStruct((B * H, n), jnp.float32),
        grid=(B // bB,),
        in_specs=[
            pl.BlockSpec((m, W * cin), lambda i: (i, 0)),
            pl.BlockSpec(w1cat.shape, lambda i: (0, 0)),
            pl.BlockSpec(w23.shape, lambda i: (0, 0, 0)),
            pl.BlockSpec(shifts.shape, lambda i: (0, 0, 0)),
            pl.BlockSpec(bn.shape, lambda i: (0, 0)),
        ],
        out_specs=pl.BlockSpec((m, n), lambda i: (i, 0)),
        compiler_params=pltpu.CompilerParams(
            dimension_semantics=("parallel",)),
    )(x_flat, w1cat, w23, shifts, bn)

    cout = n // W
    out = out_flat.reshape(B, H, W, cout)
    return jnp.transpose(out, (0, 3, 1, 2))                       # -> NCHW


# ----------------------------------------------------------------------------
# Parameter setup (deterministic, synthetic; eval-mode BatchNorm folded).
# ----------------------------------------------------------------------------
def _fold_bn(gamma, beta, mean, var, eps=1e-5):
    scale = gamma / jnp.sqrt(var + eps)
    bias = beta - mean * scale
    return scale.astype(jnp.float32), bias.astype(jnp.float32)


def init_params(key, in_planes, planes):
    ks = jax.random.split(key, 12)
    p = {}

    def conv_w(k, cout, cin, kh, kw):
        w = jax.random.normal(k, (cout, cin, kh, kw), jnp.float32) * 0.1
        return jnp.transpose(w, (2, 3, 1, 0))                     # OIHW -> HWIO

    p["w1"] = conv_w(ks[0], planes, in_planes, 3, 3)
    p["w2"] = conv_w(ks[1], planes, planes, 3, 3)
    p["w3"] = conv_w(ks[2], planes, planes, 3, 3)
    wsc = jax.random.normal(ks[3], (planes, in_planes, 1, 1), jnp.float32) * 0.1
    p["wsc"] = jnp.transpose(wsc, (2, 3, 1, 0))[0, 0]             # (in_planes, planes)

    for i, name in enumerate(["bn1", "bn2", "bn3", "bnsc"]):
        kg, kb, km, kv = jax.random.split(ks[4 + i], 4)
        gamma = 1.0 + 0.1 * jax.random.normal(kg, (planes,), jnp.float32)
        beta = 0.1 * jax.random.normal(kb, (planes,), jnp.float32)
        mean = 0.1 * jax.random.normal(km, (planes,), jnp.float32)
        var = 1.0 + 0.1 * jax.random.uniform(kv, (planes,), jnp.float32)
        p[name] = _fold_bn(gamma, beta, mean, var)
    return p


# ----------------------------------------------------------------------------
# Pure-JAX reference (independent of the Toeplitz / shift re-layout).
# ----------------------------------------------------------------------------
def _ref_conv(x_nhwc, w_hwio):
    return jax.lax.conv_general_dilated(
        x_nhwc, w_hwio, window_strides=(1, 1), padding="SAME",
        dimension_numbers=("NHWC", "HWIO", "NHWC"))


def reference_forward(x_nchw, params):
    x = jnp.transpose(x_nchw, (0, 2, 3, 1)).astype(jnp.float32)
    s1, b1 = params["bn1"]
    s2, b2 = params["bn2"]
    s3, b3 = params["bn3"]
    ssc, bsc = params["bnsc"]

    def lrelu(v):
        return jnp.where(v >= 0, v, 0.1 * v)

    o = lrelu(_ref_conv(x, params["w1"]) * s1 + b1)
    o = lrelu(_ref_conv(o, params["w2"]) * s2 + b2)
    o = _ref_conv(o, params["w3"]) * s3 + b3
    sc = jnp.einsum("bhwc,co->bhwo", x, params["wsc"]) * ssc + bsc
    o = o + sc
    return jnp.transpose(o, (0, 3, 1, 2))


# ----------------------------------------------------------------------------
if __name__ == "__main__":
    key = jax.random.PRNGKey(0)
    k_x, k_p = jax.random.split(key)

    B, in_planes, planes, H, W = 2, 4, 8, 16, 16
    x = jax.random.normal(k_x, (B, in_planes, H, W), jnp.float32)  # NCHW
    params = init_params(k_p, in_planes, planes)

    # One-time weight re-layout, kept out of the forward path (review item 6).
    packed = pack_params(params, H, W, images_per_step=B)
    fwd = jax.jit(basic_block_rn12_forward)

    out = jax.block_until_ready(fwd(x, packed))
    ref = jax.block_until_ready(reference_forward(x, params))

    assert out.shape == (B, planes, H, W), out.shape
    assert jnp.allclose(out, ref, atol=1e-4, rtol=1e-4), \
        f"max abs err {jnp.max(jnp.abs(out - ref))}"

    print("KERNEL_OK")
</pallas_src>

<mosaic_0001>
module attributes {stable_mosaic.version = 11 : i64} {
  func.func @_fused_block_kernel(%arg0: i32, %arg1: memref<32x64xf32, #tpu.memory_space<vmem>>, %arg2: memref<64x512xf32, #tpu.memory_space<vmem>>, %arg3: memref<2x128x384xf32, #tpu.memory_space<vmem>>, %arg4: memref<2x32x32xf32, #tpu.memory_space<vmem>>, %arg5: memref<8x128xf32, #tpu.memory_space<vmem>>, %arg6: memref<32x128xf32, #tpu.memory_space<vmem>>) attributes {dimension_semantics = [#tpu.dimension_semantics<parallel>], iteration_bounds = array<i64: 1>, scalar_prefetch = 0 : i64, scratch_operands = 0 : i64, tpu.core_type = #tpu.core_type<tc>, window_params = [{transform_indices = @transform_0, window_bounds = array<i64: 32, 64>}, {pipeline_mode = #tpu.pipeline_mode<synchronous>, transform_indices = @transform_1, window_bounds = array<i64: 64, 512>}, {pipeline_mode = #tpu.pipeline_mode<synchronous>, transform_indices = @transform_2, window_bounds = array<i64: 2, 128, 384>}, {pipeline_mode = #tpu.pipeline_mode<synchronous>, transform_indices = @transform_3, window_bounds = array<i64: 2, 32, 32>}, {pipeline_mode = #tpu.pipeline_mode<synchronous>, transform_indices = @transform_4, window_bounds = array<i64: 8, 128>}, {transform_indices = @transform_5, window_bounds = array<i64: 32, 128>}]} {
    %c0 = arith.constant 0 : index
    %c0_0 = arith.constant 0 : index
    %0 = vector.load %arg1[%c0, %c0_0] : memref<32x64xf32, #tpu.memory_space<vmem>>, vector<32x64xf32>
    %c0_1 = arith.constant 0 : index
    %c0_2 = arith.constant 0 : index
    %c0_3 = arith.constant 0 : index
    %1 = vector.load %arg4[%c0_1, %c0_2, %c0_3] : memref<2x32x32xf32, #tpu.memory_space<vmem>>, vector<1x32x32xf32>
    %2 = vector.shape_cast %1 : vector<1x32x32xf32> to vector<32x32xf32>
    %c1 = arith.constant 1 : index
    %c0_4 = arith.constant 0 : index
    %c0_5 = arith.constant 0 : index
    %3 = vector.load %arg4[%c1, %c0_4, %c0_5] : memref<2x32x32xf32, #tpu.memory_space<vmem>>, vector<1x32x32xf32>
    %4 = vector.shape_cast %3 : vector<1x32x32xf32> to vector<32x32xf32>
    %c0_6 = arith.constant 0 : index
    %c0_7 = arith.constant 0 : index
    %5 = vector.load %arg2[%c0_6, %c0_7] : memref<64x512xf32, #tpu.memory_space<vmem>>, vector<64x512xf32>
    %cst = arith.constant dense<0.000000e+00> : vector<32x512xf32>
    %6 = tpu.matmul %0, %5, %cst {dimension_numbers = #tpu.dot_dimension_numbers<[1], [0], [0], [1], [0, 0, 1, 1], [], []>} : vector<32x64xf32>, vector<64x512xf32>, vector<32x512xf32> -> vector<32x512xf32>
    %7 = vector.extract_strided_slice %6 {offsets = [0, 0], sizes = [32, 128], strides = [1, 1]} : vector<32x512xf32> to vector<32x128xf32>
    %cst_8 = arith.constant dense<0.000000e+00> : vector<32x128xf32>
    %8 = tpu.matmul %2, %7, %cst_8 {dimension_numbers = #tpu.dot_dimension_numbers<[1], [0], [0], [1], [0, 0, 1, 1], [], []>} : vector<32x32xf32>, vector<32x128xf32>, vector<32x128xf32> -> vector<32x128xf32>
    %9 = vector.extract_strided_slice %6 {offsets = [0, 128], sizes = [32, 128], strides = [1, 1]} : vector<32x512xf32> to vector<32x128xf32>
    %10 = arith.addf %8, %9 : vector<32x128xf32>
    %11 = vector.extract_strided_slice %6 {offsets = [0, 256], sizes = [32, 128], strides = [1, 1]} : vector<32x512xf32> to vector<32x128xf32>
    %cst_9 = arith.constant dense<0.000000e+00> : vector<32x128xf32>
    %12 = tpu.matmul %4, %11, %cst_9 {dimension_numbers = #tpu.dot_dimension_numbers<[1], [0], [0], [1], [0, 0, 1, 1], [], []>} : vector<32x32xf32>, vector<32x128xf32>, vector<32x128xf32> -> vector<32x128xf32>
    %13 = arith.addf %10, %12 : vector<32x128xf32>
    %c0_10 = arith.constant 0 : index
    %c0_11 = arith.constant 0 : index
    %14 = vector.load %arg5[%c0_10, %c0_11] : memref<8x128xf32, #tpu.memory_space<vmem>>, vector<1x128xf32>
    %15 = vector.broadcast %14 : vector<1x128xf32> to vector<32x128xf32>
    %16 = arith.mulf %13, %15 : vector<32x128xf32>
    %c1_12 = arith.constant 1 : index
    %c0_13 = arith.constant 0 : index
    %17 = vector.load %arg5[%c1_12, %c0_13] : memref<8x128xf32, #tpu.memory_space<vmem>>, vector<1x128xf32>
    %18 = vector.broadcast %17 : vector<1x128xf32> to vector<32x128xf32>
    %19 = arith.addf %16, %18 : vector<32x128xf32>
    %cst_14 = arith.constant 0.000000e+00 : f32
    %20 = vector.broadcast %cst_14 : f32 to vector<32x128xf32>
    %21 = arith.cmpf oge, %19, %20 : vector<32x128xf32>
    %cst_15 = arith.constant 1.000000e-01 : f32
    %22 = vector.broadcast %cst_15 : f32 to vector<32x128xf32>
    %23 = arith.mulf %22, %19 : vector<32x128xf32>
    %24 = arith.select %21, %19, %23 : vector<32x128xi1>, vector<32x128xf32>
    %25 = vector.extract_strided_slice %6 {offsets = [0, 384], sizes = [32, 128], strides = [1, 1]} : vector<32x512xf32> to vector<32x128xf32>
    %c6 = arith.constant 6 : index
    %c0_16 = arith.constant 0 : index
    %26 = vector.load %arg5[%c6, %c0_16] : memref<8x128xf32, #tpu.memory_space<vmem>>, vector<1x128xf32>
    %27 = vector.broadcast %26 : vector<1x128xf32> to vector<32x128xf32>
    %28 = arith.mulf %25, %27 : vector<32x128xf32>
    %c7 = arith.constant 7 : index
    %c0_17 = arith.constant 0 : index
    %29 = vector.load %arg5[%c7, %c0_17] : memref<8x128xf32, #tpu.memory_space<vmem>>, vector<1x128xf32>
    %30 = vector.broadcast %29 : vector<1x128xf32> to vector<32x128xf32>
    %31 = arith.addf %28, %30 : vector<32x128xf32>
    %c0_18 = arith.constant 0 : index
    %c0_19 = arith.constant 0 : index
    %c0_20 = arith.constant 0 : index
    %32 = vector.load %arg3[%c0_18, %c0_19, %c0_20] : memref<2x128x384xf32, #tpu.memory_space<vmem>>, vector<1x128x384xf32>
    %33 = vector.shape_cast %32 : vector<1x128x384xf32> to vector<128x384xf32>
    %cst_21 = arith.constant dense<0.000000e+00> : vector<32x384xf32>
    %34 = tpu.matmul %24, %33, %cst_21 {dimension_numbers = #tpu.dot_dimension_numbers<[1], [0], [0], [1], [0, 0, 1, 1], [], []>} : vector<32x128xf32>, vector<128x384xf32>, vector<32x384xf32> -> vector<32x384xf32>
    %35 = vector.extract_strided_slice %34 {offsets = [0, 0], sizes = [32, 128], strides = [1, 1]} : vector<32x384xf32> to vector<32x128xf32>
    %cst_22 = arith.constant dense<0.000000e+00> : vector<32x128xf32>
    %36 = tpu.matmul %2, %35, %cst_22 {dimension_numbers = #tpu.dot_dimension_numbers<[1], [0], [0], [1], [0, 0, 1, 1], [], []>} : vector<32x32xf32>, vector<32x128xf32>, vector<32x128xf32> -> vector<32x128xf32>
    %37 = vector.extract_strided_slice %34 {offsets = [0, 128], sizes = [32, 128], strides = [1, 1]} : vector<32x384xf32> to vector<32x128xf32>
    %38 = arith.addf %36, %37 : vector<32x128xf32>
    %39 = vector.extract_strided_slice %34 {offsets = [0, 256], sizes = [32, 128], strides = [1, 1]} : vector<32x384xf32> to vector<32x128xf32>
    %cst_23 = arith.constant dense<0.000000e+00> : vector<32x128xf32>
    %40 = tpu.matmul %4, %39, %cst_23 {dimension_numbers = #tpu.dot_dimension_numbers<[1], [0], [0], [1], [0, 0, 1, 1], [], []>} : vector<32x32xf32>, vector<32x128xf32>, vector<32x128xf32> -> vector<32x128xf32>
    %41 = arith.addf %38, %40 : vector<32x128xf32>
    %c2 = arith.constant 2 : index
    %c0_24 = arith.constant 0 : index
    %42 = vector.load %arg5[%c2, %c0_24] : memref<8x128xf32, #tpu.memory_space<vmem>>, vector<1x128xf32>
    %43 = vector.broadcast %42 : vector<1x128xf32> to vector<32x128xf32>
    %44 = arith.mulf %41, %43 : vector<32x128xf32>
    %c3 = arith.constant 3 : index
    %c0_25 = arith.constant 0 : index
    %45 = vector.load %arg5[%c3, %c0_25] : memref<8x128xf32, #tpu.memory_space<vmem>>, vector<1x128xf32>
    %46 = vector.broadcast %45 : vector<1x128xf32> to vector<32x128xf32>
    %47 = arith.addf %44, %46 : vector<32x128xf32>
    %cst_26 = arith.constant 0.000000e+00 : f32
    %48 = vector.broadcast %cst_26 : f32 to vector<32x128xf32>
    %49 = arith.cmpf oge, %47, %48 : vector<32x128xf32>
    %cst_27 = arith.constant 1.000000e-01 : f32
    %50 = vector.broadcast %cst_27 : f32 to vector<32x128xf32>
    %51 = arith.mulf %50, %47 : vector<32x128xf32>
    %52 = arith.select %49, %47, %51 : vector<32x128xi1>, vector<32x128xf32>
    %c1_28 = arith.constant 1 : index
    %c0_29 = arith.constant 0 : index
    %c0_30 = arith.constant 0 : index
    %53 = vector.load %arg3[%c1_28, %c0_29, %c0_30] : memref<2x128x384xf32, #tpu.memory_space<vmem>>, vector<1x128x384xf32>
    %54 = vector.shape_cast %53 : vector<1x128x384xf32> to vector<128x384xf32>
    %cst_31 = arith.constant dense<0.000000e+00> : vector<32x384xf32>
    %55 = tpu.matmul %52, %54, %cst_31 {dimension_numbers = #tpu.dot_dimension_numbers<[1], [0], [0], [1], [0, 0, 1, 1], [], []>} : vector<32x128xf32>, vector<128x384xf32>, vector<32x384xf32> -> vector<32x384xf32>
    %56 = vector.extract_strided_slice %55 {offsets = [0, 0], sizes = [32, 128], strides = [1, 1]} : vector<32x384xf32> to vector<32x128xf32>
    %cst_32 = arith.constant dense<0.000000e+00> : vector<32x128xf32>
    %57 = tpu.matmul %2, %56, %cst_32 {dimension_numbers = #tpu.dot_dimension_numbers<[1], [0], [0], [1], [0, 0, 1, 1], [], []>} : vector<32x32xf32>, vector<32x128xf32>, vector<32x128xf32> -> vector<32x128xf32>
    %58 = vector.extract_strided_slice %55 {offsets = [0, 128], sizes = [32, 128], strides = [1, 1]} : vector<32x384xf32> to vector<32x128xf32>
    %59 = arith.addf %57, %58 : vector<32x128xf32>
    %60 = vector.extract_strided_slice %55 {offsets = [0, 256], sizes = [32, 128], strides = [1, 1]} : vector<32x384xf32> to vector<32x128xf32>
    %cst_33 = arith.constant dense<0.000000e+00> : vector<32x128xf32>
    %61 = tpu.matmul %4, %60, %cst_33 {dimension_numbers = #tpu.dot_dimension_numbers<[1], [0], [0], [1], [0, 0, 1, 1], [], []>} : vector<32x32xf32>, vector<32x128xf32>, vector<32x128xf32> -> vector<32x128xf32>
    %62 = arith.addf %59, %61 : vector<32x128xf32>
    %c4 = arith.constant 4 : index
    %c0_34 = arith.constant 0 : index
    %63 = vector.load %arg5[%c4, %c0_34] : memref<8x128xf32, #tpu.memory_space<vmem>>, vector<1x128xf32>
    %64 = vector.broadcast %63 : vector<1x128xf32> to vector<32x128xf32>
    %65 = arith.mulf %62, %64 : vector<32x128xf32>
    %c5 = arith.constant 5 : index
    %c0_35 = arith.constant 0 : index
    %66 = vector.load %arg5[%c5, %c0_35] : memref<8x128xf32, #tpu.memory_space<vmem>>, vector<1x128xf32>
    %67 = vector.broadcast %66 : vector<1x128xf32> to vector<32x128xf32>
    %68 = arith.addf %65, %67 : vector<32x128xf32>
    %69 = arith.addf %68, %31 : vector<32x128xf32>
    %c0_36 = arith.constant 0 : index
    %c0_37 = arith.constant 0 : index
    %70 = vector.load %arg6[%c0_36, %c0_37] : memref<32x128xf32, #tpu.memory_space<vmem>>, vector<32x128xf32>
    tpu.vector_store %arg6[%c0_36, %c0_37], %69 {strides = array<i32>} : memref<32x128xf32, #tpu.memory_space<vmem>>, vector<32x128xf32>,
    return
  }
  func.func @transform_0(%arg0: i32) -> (i32, i32) {
    %c0_i32 = arith.constant 0 : i32
    %c0_i32_0 = arith.constant 0 : i32
    return %arg0, %c0_i32 : i32, i32
  }
  func.func @transform_1(%arg0: i32) -> (i32, i32) {
    %c0_i32 = arith.constant 0 : i32
    %c0_i32_0 = arith.constant 0 : i32
    %c0_i32_1 = arith.constant 0 : i32
    return %c0_i32, %c0_i32_0 : i32, i32
  }
  func.func @transform_2(%arg0: i32) -> (i32, i32, i32) {
    %c0_i32 = arith.constant 0 : i32
    %c0_i32_0 = arith.constant 0 : i32
    %c0_i32_1 = arith.constant 0 : i32
    %c0_i32_2 = arith.constant 0 : i32
    return %c0_i32, %c0_i32_0, %c0_i32_1 : i32, i32, i32
  }
  func.func @transform_3(%arg0: i32) -> (i32, i32, i32) {
    %c0_i32 = arith.constant 0 : i32
    %c0_i32_0 = arith.constant 0 : i32
    %c0_i32_1 = arith.constant 0 : i32
    %c0_i32_2 = arith.constant 0 : i32
    return %c0_i32, %c0_i32_0, %c0_i32_1 : i32, i32, i32
  }
  func.func @transform_4(%arg0: i32) -> (i32, i32) {
    %c0_i32 = arith.constant 0 : i32
    %c0_i32_0 = arith.constant 0 : i32
    %c0_i32_1 = arith.constant 0 : i32
    return %c0_i32, %c0_i32_0 : i32, i32
  }
  func.func @transform_5(%arg0: i32) -> (i32, i32) {
    %c0_i32 = arith.constant 0 : i32
    %c0_i32_0 = arith.constant 0 : i32
    return %arg0, %c0_i32 : i32, i32
  }
}

</mosaic_0001>

<llo_original>
// kernel: basic_block_rn12_forward.1
$region0: #{basic_block_rn12_forward.1}
  #allocation0 [shape = 'u32[]', space=smem, size = 0x4, offset = 0x4, fixed_abs, tag = 'smem constant byte address 0x4 - core index']
  #allocation1 [shape = 'u32[144,128]{1,0:T(1,128)}', space=vmem, size = 0x12000, scoped, tag = 'internal scratch']
  %s0 = inlined_call_operand.vmem [shape: f32[32,64], index: 0, kind: input, shape index: {}]
  %s1 = inlined_call_operand.vmem [shape: f32[64,512], index: 1, kind: input, shape index: {}]
  %s2 = inlined_call_operand.hbm [shape: f32[2,128,384], index: 2, kind: input, shape index: {}]
  %s3 = inlined_call_operand.vmem [shape: f32[2,32,32], index: 3, kind: input, shape index: {}]
  %s4 = inlined_call_operand.vmem [shape: f32[8,128], index: 4, kind: input, shape index: {}]
  %s5 = inlined_call_operand.vmem [shape: f32[32,128], index: 5, kind: output, shape index: {}]
  %s6 = sld [smem:[#allocation0]]
  $region34: #{basic_block_rn12_forward.1} parent=0
    _
  %s8 = ssub.s32 1, %s6
  %s9 = scalar_select 0, %s8, %s6
  $region1: #{basic_block_rn12_forward.1} parent=0
    #allocation2 [shape = 'u8[393216]{0}', space=vmem, size = 0x60000, scoped, tag = 'input window, operand 2, single buffered']
    #allocation3 [shape = 's32[1]{0}', space=sflag, size = 0x4, scoped, tag = 'scoped memory for basic_block_rn12_forward.1']
    %10 = vsyncpa [#allocation3], 0
    // Predicated region
    $region2: #{basic_block_rn12_forward.1} parent=1 // pred_check
      _
    $region3: #{basic_block_rn12_forward.1} parent=1 // pred_check_branch
      %12 = sbr.rel (0) target = $region5
    $region4: #{basic_block_rn12_forward.1} parent=1 // pred_region
      _
    $region5: #{basic_block_rn12_forward.1} parent=1 // pred_fallthru
      _
    // Predicated region
    $region6: #{basic_block_rn12_forward.1} parent=1 // pred_check
      _
    $region7: #{basic_block_rn12_forward.1} parent=1 // pred_check_branch
      %14 = sbr.rel (0) target = $region9
    $region8: #{basic_block_rn12_forward.1} parent=1 // pred_region
      _
    $region9: #{basic_block_rn12_forward.1} parent=1 // pred_fallthru
      _
    // Predicated region
    $region10: #{basic_block_rn12_forward.1} parent=1 // pred_check
      _
    $region11: #{basic_block_rn12_forward.1} parent=1 // pred_check_branch
      %16 = sbr.rel (0) target = $region13
    $region12: #{basic_block_rn12_forward.1} parent=1 // pred_region
      %s18 = ssub.s32 12288, 12288
      %19 = vsyncadd [#allocation3], %s18
      %s20 = sshll.u32 [#allocation2], 4
      %s21 = int_to_ptr.vmem [resolvable:$true] %s20
      %26 = dma.hbm_to_vmem [thread:$0]  %s2, 12288, %s21, [#allocation3], 384, 384, 24
    $region13: #{basic_block_rn12_forward.1} parent=1 // pred_fallthru
      _
    // Predicated region
    $region14: #{basic_block_rn12_forward.1} parent=1 // pred_check
      _
    $region15: #{basic_block_rn12_forward.1} parent=1 // pred_check_branch
      %28 = sbr.rel (0) target = $region17
    $region16: #{basic_block_rn12_forward.1} parent=1 // pred_region
      _
    $region17: #{basic_block_rn12_forward.1} parent=1 // pred_fallthru
      _
    // Predicated region
    $region18: #{basic_block_rn12_forward.1} parent=1 // pred_check
      _
    $region19: #{basic_block_rn12_forward.1} parent=1 // pred_check_branch
      %30 = sbr.rel (0) target = $region21
    $region20: #{basic_block_rn12_forward.1} parent=1 // pred_region
      _
    $region21: #{basic_block_rn12_forward.1} parent=1 // pred_fallthru
      _
    // Predicated region
    $region22: #{basic_block_rn12_forward.1} parent=1 // pred_check
      _
    $region23: #{basic_block_rn12_forward.1} parent=1 // pred_check_branch
      %32 = sbr.rel (0) target = $region25
    $region24: #{basic_block_rn12_forward.1} parent=1 // pred_region
      %33 = dma.done [#allocation3], 12288
    $region25: #{basic_block_rn12_forward.1} parent=1 // pred_fallthru
      _
    %v34 = vld [vmem:[%s0] sm:$0xff]
    %v35 = vld [vmem:[%s0 + $0x8] sm:$0xff]
    %v36 = vld [vmem:[%s0 + $0x10] sm:$0xff]
    %v37 = vld [vmem:[%s0 + $0x18] sm:$0xff]
    %v38 = vld [vmem:[%s3] sm:$0xff]
    %v39 = vld [vmem:[%s3 + $0x8] sm:$0xff]
    %v40 = vld [vmem:[%s3 + $0x10] sm:$0xff]
    %v41 = vld [vmem:[%s3 + $0x18] sm:$0xff]
    %s42 = scalar_lea.vmem %s3, 32
    %v43 = vld [vmem:[%s42] sm:$0xff]
    %v44 = vld [vmem:[%s42 + $0x8] sm:$0xff]
    %v45 = vld [vmem:[%s42 + $0x10] sm:$0xff]
    %v46 = vld [vmem:[%s42 + $0x18] sm:$0xff]
    %v47 = vld [vmem:[%s1] sm:$0xff]
    %v48 = vld [vmem:[%s1 + $0x8] sm:$0xff]
    %v49 = vld [vmem:[%s1 + $0x10] sm:$0xff]
    %v50 = vld [vmem:[%s1 + $0x18] sm:$0xff]
    %v51 = vld [vmem:[%s1 + $0x20] sm:$0xff]
    %v52 = vld [vmem:[%s1 + $0x28] sm:$0xff]
    %v53 = vld [vmem:[%s1 + $0x30] sm:$0xff]
    %v54 = vld [vmem:[%s1 + $0x38] sm:$0xff]
    %v55 = vld [vmem:[%s1 + $0x40] sm:$0xff]
    %v56 = vld [vmem:[%s1 + $0x48] sm:$0xff]
    %v57 = vld [vmem:[%s1 + $0x50] sm:$0xff]
    %v58 = vld [vmem:[%s1 + $0x58] sm:$0xff]
    %v59 = vld [vmem:[%s1 + $0x60] sm:$0xff]
    %v60 = vld [vmem:[%s1 + $0x68] sm:$0xff]
    %v61 = vld [vmem:[%s1 + $0x70] sm:$0xff]
    %v62 = vld [vmem:[%s1 + $0x78] sm:$0xff]
    %v63 = vld [vmem:[%s1 + $0x80] sm:$0xff]
    %v64 = vld [vmem:[%s1 + $0x88] sm:$0xff]
    %v65 = vld [vmem:[%s1 + $0x90] sm:$0xff]
    %v66 = vld [vmem:[%s1 + $0x98] sm:$0xff]
    %v67 = vld [vmem:[%s1 + $0xa0] sm:$0xff]
    %v68 = vld [vmem:[%s1 + $0xa8] sm:$0xff]
    %v69 = vld [vmem:[%s1 + $0xb0] sm:$0xff]
    %v70 = vld [vmem:[%s1 + $0xb8] sm:$0xff]
    %v71 = vld [vmem:[%s1 + $0xc0] sm:$0xff]
    %v72 = vld [vmem:[%s1 + $0xc8] sm:$0xff]
    %v73 = vld [vmem:[%s1 + $0xd0] sm:$0xff]
    %v74 = vld [vmem:[%s1 + $0xd8] sm:$0xff]
    %v75 = vld [vmem:[%s1 + $0xe0] sm:$0xff]
    %v76 = vld [vmem:[%s1 + $0xe8] sm:$0xff]
    %v77 = vld [vmem:[%s1 + $0xf0] sm:$0xff]
    %v78 = vld [vmem:[%s1 + $0xf8] sm:$0xff]
    %vm79 = vcmask 523264
    %v81 = vsel %vm79, %v34, 0
    %v84 = vsel %vm79, %v35, 0
    %v87 = vsel %vm79, %v36, 0
    %v90 = vsel %vm79, %v37, 0
    %92 = vmatprep.subr.mxu0 %v48
    %93 = vmatpush1.msra.mxu0 %v47
    %94 = vmatprep.subr.mxu0 %v52
    %95 = vmatpush1.msra.mxu0 %v51
    %96 = vmatprep.subr.mxu0 %v56
    %97 = vmatpush1.msra.mxu0 %v55
    %98 = vmatprep.subr.mxu0 %v60
    %99 = vmatpush1.msra.mxu0 %v59
    %100 = vmatprep.subr.mxu0 %v64
    %101 = vmatpush1.msra.mxu0 %v63
    %102 = vmatprep.subr.mxu0 %v68
    %103 = vmatpush1.msra.mxu0 %v67
    %104 = vmatprep.subr.mxu0 %v72
    %105 = vmatpush1.msra.mxu0 %v71
    %106 = vmatprep.subr.mxu0 %v76
    %107 = vmatpush1.msra.mxu0 %v75
    %108 = vmatprep.subr.mxu0 0.0
    %109 = vmatpush1.msra.mxu0 0.0
    %110 = vmatprep.subr.mxu0 0.0
    %111 = vmatpush1.msra.mxu0 0.0
    %112 = vmatprep.subr.mxu0 0.0
    %113 = vmatpush1.msra.mxu0 0.0
    %114 = vmatprep.subr.mxu0 0.0
    %115 = vmatpush1.msra.mxu0 0.0
    %116 = vmatprep.subr.mxu0 0.0
    %117 = vmatpush1.msra.mxu0 0.0
    %118 = vmatprep.subr.mxu0 0.0
    %119 = vmatpush1.msra.mxu0 0.0
    %120 = vmatprep.subr.mxu0 0.0
    %121 = vmatpush1.msra.mxu0 0.0
    %122 = vmatprep.subr.mxu0 0.0
    %123 = vmatpush1.msra.mxu0 0.0
    %124 = vmatprep.subr.mxu0 0.0
    %125 = vmatpush1.msra.mxu0 0.0
    %126 = vmatprep.subr.mxu0 0.0
    %127 = vmatpush1.msra.mxu0 0.0
    %128 = vmatprep.subr.mxu0 0.0
    %129 = vmatpush1.msra.mxu0 0.0
    %130 = vmatprep.subr.mxu0 0.0
    %131 = vmatpush1.msra.mxu0 0.0
    %132 = vmatprep.subr.mxu0 0.0
    %133 = vmatpush1.msra.mxu0 0.0
    %134 = vmatprep.subr.mxu0 0.0
    %135 = vmatpush1.msra.mxu0 0.0
    %136 = vmatprep.subr.mxu0 0.0
    %137 = vmatpush1.msra.mxu0 0.0
    %138 = vmatprep.subr.mxu0 0.0
    %139 = vmatpush1.msra.mxu0 0.0
    %140 = vmatprep.subr.mxu0 0.0
    %141 = vmatpush1.msra.mxu0 0.0
    %142 = vmatprep.subr.mxu0 0.0
    %143 = vmatpush1.msra.mxu0 0.0
    %144 = vmatprep.subr.mxu0 0.0
    %145 = vmatpush1.msra.mxu0 0.0
    %146 = vmatprep.subr.mxu0 0.0
    %147 = vmatpush1.msra.mxu0 0.0
    %148 = vmatprep.subr.mxu0 0.0
    %149 = vmatpush1.msra.mxu0 0.0
    %150 = vmatprep.subr.mxu0 0.0
    %151 = vmatpush1.msra.mxu0 0.0
    %152 = vmatprep.subr.mxu0 0.0
    %153 = vmatpush1.msra.mxu0 0.0
    %154 = vmatprep.subr.mxu0 0.0
    %155 = vmatpush1.msra.mxu0 0.0
    %156 = vmatprep.mubr.f32.mxu0 0.0
    %157 = vmatmul.mubr.f32.gmra.mrb[0].mxu0 %v81
    %v158 = vpop.f32.mrb[0].mxu0
    %v159 = vadd.f32 0.0, %v158
    %v160 = vpop.f32.mrb[0].mxu0
    %v161 = vadd.f32 0.0, %v160
    %162 = vmatprep.mubr.f32.mxu0 0.0
    %163 = vmatmul.mubr.f32.gmra.mrb[0].mxu0 %v84
    %v164 = vpop.f32.mrb[0].mxu0
    %v165 = vadd.f32 0.0, %v164
    %v166 = vpop.f32.mrb[0].mxu0
    %v167 = vadd.f32 0.0, %v166
    %168 = vmatprep.mubr.f32.mxu0 0.0
    %169 = vmatmul.mubr.f32.gmra.mrb[0].mxu0 %v87
    %v170 = vpop.f32.mrb[0].mxu0
    %v171 = vadd.f32 0.0, %v170
    %v172 = vpop.f32.mrb[0].mxu0
    %v173 = vadd.f32 0.0, %v172
    %174 = vmatprep.mubr.f32.mxu0 0.0
    %175 = vmatmul.mubr.f32.gmra.mrb[0].mxu0 %v90
    %v176 = vpop.f32.mrb[0].mxu0
    %v177 = vadd.f32 0.0, %v176
    %v178 = vpop.f32.mrb[0].mxu0
    %v179 = vadd.f32 0.0, %v178
    %180 = vdwg.mxu0
    %181 = vmatprep.subr.mxu0 %v50
    %182 = vmatpush1.msra.mxu0 %v49
    %183 = vmatprep.subr.mxu0 %v54
    %184 = vmatpush1.msra.mxu0 %v53
    %185 = vmatprep.subr.mxu0 %v58
    %186 = vmatpush1.msra.mxu0 %v57
    %187 = vmatprep.subr.mxu0 %v62
    %188 = vmatpush1.msra.mxu0 %v61
    %189 = vmatprep.subr.mxu0 %v66
    %190 = vmatpush1.msra.mxu0 %v65
    %191 = vmatprep.subr.mxu0 %v70
    %192 = vmatpush1.msra.mxu0 %v69
    %193 = vmatprep.subr.mxu0 %v74
    %194 = vmatpush1.msra.mxu0 %v73
    %195 = vmatprep.subr.mxu0 %v78
    %196 = vmatpush1.msra.mxu0 %v77
    %197 = vmatprep.subr.mxu0 0.0
    %198 = vmatpush1.msra.mxu0 0.0
    %199 = vmatprep.subr.mxu0 0.0
    %200 = vmatpush1.msra.mxu0 0.0
    %201 = vmatprep.subr.mxu0 0.0
    %202 = vmatpush1.msra.mxu0 0.0
    %203 = vmatprep.subr.mxu0 0.0
    %204 = vmatpush1.msra.mxu0 0.0
    %205 = vmatprep.subr.mxu0 0.0
    %206 = vmatpush1.msra.mxu0 0.0
    %207 = vmatprep.subr.mxu0 0.0
    %208 = vmatpush1.msra.mxu0 0.0
    %209 = vmatprep.subr.mxu0 0.0
    %210 = vmatpush1.msra.mxu0 0.0
    %211 = vmatprep.subr.mxu0 0.0
    %212 = vmatpush1.msra.mxu0 0.0
    %213 = vmatprep.subr.mxu0 0.0
    %214 = vmatpush1.msra.mxu0 0.0
    %215 = vmatprep.subr.mxu0 0.0
    %216 = vmatpush1.msra.mxu0 0.0
    %217 = vmatprep.subr.mxu0 0.0
    %218 = vmatpush1.msra.mxu0 0.0
    %219 = vmatprep.subr.mxu0 0.0
    %220 = vmatpush1.msra.mxu0 0.0
    %221 = vmatprep.subr.mxu0 0.0
    %222 = vmatpush1.msra.mxu0 0.0
    %223 = vmatprep.subr.mxu0 0.0
    %224 = vmatpush1.msra.mxu0 0.0
    %225 = vmatprep.subr.mxu0 0.0
    %226 = vmatpush1.msra.mxu0 0.0
    %227 = vmatprep.subr.mxu0 0.0
    %228 = vmatpush1.msra.mxu0 0.0
    %229 = vmatprep.subr.mxu0 0.0
    %230 = vmatpush1.msra.mxu0 0.0
    %231 = vmatprep.subr.mxu0 0.0
    %232 = vmatpush1.msra.mxu0 0.0
    %233 = vmatprep.subr.mxu0 0.0
    %234 = vmatpush1.msra.mxu0 0.0
    %235 = vmatprep.subr.mxu0 0.0
    %236 = vmatpush1.msra.mxu0 0.0
    %237 = vmatprep.subr.mxu0 0.0
    %238 = vmatpush1.msra.mxu0 0.0
    %239 = vmatprep.subr.mxu0 0.0
    %240 = vmatpush1.msra.mxu0 0.0
    %241 = vmatprep.subr.mxu0 0.0
    %242 = vmatpush1.msra.mxu0 0.0
    %243 = vmatprep.subr.mxu0 0.0
    %244 = vmatpush1.msra.mxu0 0.0
    %245 = vmatprep.mubr.f32.mxu0 0.0
    %246 = vmatmul.mubr.f32.gmra.mrb[0].mxu0 %v81
    %v247 = vpop.f32.mrb[0].mxu0
    %v248 = vadd.f32 0.0, %v247
    %v249 = vpop.f32.mrb[0].mxu0
    %v250 = vadd.f32 0.0, %v249
    %251 = vmatprep.mubr.f32.mxu0 0.0
    %252 = vmatmul.mubr.f32.gmra.mrb[0].mxu0 %v84
    %v253 = vpop.f32.mrb[0].mxu0
    %v254 = vadd.f32 0.0, %v253
    %v255 = vpop.f32.mrb[0].mxu0
    %v256 = vadd.f32 0.0, %v255
    %257 = vmatprep.mubr.f32.mxu0 0.0
    %258 = vmatmul.mubr.f32.gmra.mrb[0].mxu0 %v87
    %v259 = vpop.f32.mrb[0].mxu0
    %v260 = vadd.f32 0.0, %v259
    %v261 = vpop.f32.mrb[0].mxu0
    %v262 = vadd.f32 0.0, %v261
    %263 = vmatprep.mubr.f32.mxu0 0.0
    %264 = vmatmul.mubr.f32.gmra.mrb[0].mxu0 %v90
    %v265 = vpop.f32.mrb[0].mxu0
    %v266 = vadd.f32 0.0, %v265
    %v267 = vpop.f32.mrb[0].mxu0
    %v268 = vadd.f32 0.0, %v267
    %269 = vdwg.mxu0
    %vm270 = vcmask 261120
    %v272 = vsel %vm270, %v38, 0
    %v275 = vsel %vm270, %v39, 0
    %v278 = vsel %vm270, %v40, 0
    %v281 = vsel %vm270, %v41, 0
    %283 = vmatprep.subr.mxu0 0.0
    %284 = vmatpush1.msra.mxu0 %v159
    %285 = vmatprep.subr.mxu0 0.0
    %286 = vmatpush1.msra.mxu0 %v165
    %287 = vmatprep.subr.mxu0 0.0
    %288 = vmatpush1.msra.mxu0 %v171
    %289 = vmatprep.subr.mxu0 0.0
    %290 = vmatpush1.msra.mxu0 %v177
    %291 = vmatprep.subr.mxu0 0.0
    %292 = vmatpush1.msra.mxu0 0.0
    %293 = vmatprep.subr.mxu0 0.0
    %294 = vmatpush1.msra.mxu0 0.0
    %295 = vmatprep.subr.mxu0 0.0
    %296 = vmatpush1.msra.mxu0 0.0
    %297 = vmatprep.subr.mxu0 0.0
    %298 = vmatpush1.msra.mxu0 0.0
    %299 = vmatprep.subr.mxu0 0.0
    %300 = vmatpush1.msra.mxu0 0.0
    %301 = vmatprep.subr.mxu0 0.0
    %302 = vmatpush1.msra.mxu0 0.0
    %303 = vmatprep.subr.mxu0 0.0
    %304 = vmatpush1.msra.mxu0 0.0
    %305 = vmatprep.subr.mxu0 0.0
    %306 = vmatpush1.msra.mxu0 0.0
    %307 = vmatprep.subr.mxu0 0.0
    %308 = vmatpush1.msra.mxu0 0.0
    %309 = vmatprep.subr.mxu0 0.0
    %310 = vmatpush1.msra.mxu0 0.0
    %311 = vmatprep.subr.mxu0 0.0
    %312 = vmatpush1.msra.mxu0 0.0
    %313 = vmatprep.subr.mxu0 0.0
    %314 = vmatpush1.msra.mxu0 0.0
    %315 = vmatprep.subr.mxu0 0.0
    %316 = vmatpush1.msra.mxu0 0.0
    %317 = vmatprep.subr.mxu0 0.0
    %318 = vmatpush1.msra.mxu0 0.0
    %319 = vmatprep.subr.mxu0 0.0
    %320 = vmatpush1.msra.mxu0 0.0
    %321 = vmatprep.subr.mxu0 0.0
    %322 = vmatpush1.msra.mxu0 0.0
    %323 = vmatprep.subr.mxu0 0.0
    %324 = vmatpush1.msra.mxu0 0.0
    %325 = vmatprep.subr.mxu0 0.0
    %326 = vmatpush1.msra.mxu0 0.0
    %327 = vmatprep.subr.mxu0 0.0
    %328 = vmatpush1.msra.mxu0 0.0
    %329 = vmatprep.subr.mxu0 0.0
    %330 = vmatpush1.msra.mxu0 0.0
    %331 = vmatprep.subr.mxu0 0.0
    %332 = vmatpush1.msra.mxu0 0.0
    %333 = vmatprep.subr.mxu0 0.0
    %334 = vmatpush1.msra.mxu0 0.0
    %335 = vmatprep.subr.mxu0 0.0
    %336 = vmatpush1.msra.mxu0 0.0
    %337 = vmatprep.subr.mxu0 0.0
    %338 = vmatpush1.msra.mxu0 0.0
    %339 = vmatprep.subr.mxu0 0.0
    %340 = vmatpush1.msra.mxu0 0.0
    %341 = vmatprep.subr.mxu0 0.0
    %342 = vmatpush1.msra.mxu0 0.0
    %343 = vmatprep.subr.mxu0 0.0
    %344 = vmatpush1.msra.mxu0 0.0
    %345 = vmatprep.subr.mxu0 0.0
    %346 = vmatpush1.msra.mxu0 0.0
    %347 = vmatprep.mubr.f32.mxu0 0.0
    %348 = vmatmul.mubr.f32.gmra.mrb[0].mxu0 %v272
    %v349 = vpop.f32.mrb[0].mxu0
    %v350 = vadd.f32 %v161, %v349
    %v351 = vpop.f32.mrb[0].mxu0
    %352 = vmatprep.mubr.f32.mxu0 0.0
    %353 = vmatmul.mubr.f32.gmra.mrb[0].mxu0 %v275
    %v354 = vpop.f32.mrb[0].mxu0
    %v355 = vadd.f32 %v167, %v354
    %v356 = vpop.f32.mrb[0].mxu0
    %357 = vmatprep.mubr.f32.mxu0 0.0
    %358 = vmatmul.mubr.f32.gmra.mrb[0].mxu0 %v278
    %v359 = vpop.f32.mrb[0].mxu0
    %v360 = vadd.f32 %v173, %v359
    %v361 = vpop.f32.mrb[0].mxu0
    %362 = vmatprep.mubr.f32.mxu0 0.0
    %363 = vmatmul.mubr.f32.gmra.mrb[0].mxu0 %v281
    %v364 = vpop.f32.mrb[0].mxu0
    %v365 = vadd.f32 %v179, %v364
    %v366 = vpop.f32.mrb[0].mxu0
    %367 = vdwg.mxu0
    %v369 = vsel %vm270, %v43, 0
    %v372 = vsel %vm270, %v44, 0
    %v375 = vsel %vm270, %v45, 0
    %v378 = vsel %vm270, %v46, 0
    %380 = vmatprep.subr.mxu0 0.0
    %381 = vmatpush1.msra.mxu0 %v248
    %382 = vmatprep.subr.mxu0 0.0
    %383 = vmatpush1.msra.mxu0 %v254
    %384 = vmatprep.subr.mxu0 0.0
    %385 = vmatpush1.msra.mxu0 %v260
    %386 = vmatprep.subr.mxu0 0.0
    %387 = vmatpush1.msra.mxu0 %v266
    %388 = vmatprep.subr.mxu0 0.0
    %389 = vmatpush1.msra.mxu0 0.0
    %390 = vmatprep.subr.mxu0 0.0
    %391 = vmatpush1.msra.mxu0 0.0
    %392 = vmatprep.subr.mxu0 0.0
    %393 = vmatpush1.msra.mxu0 0.0
    %394 = vmatprep.subr.mxu0 0.0
    %395 = vmatpush1.msra.mxu0 0.0
    %396 = vmatprep.subr.mxu0 0.0
    %397 = vmatpush1.msra.mxu0 0.0
    %398 = vmatprep.subr.mxu0 0.0
    %399 = vmatpush1.msra.mxu0 0.0
    %400 = vmatprep.subr.mxu0 0.0
    %401 = vmatpush1.msra.mxu0 0.0
    %402 = vmatprep.subr.mxu0 0.0
    %403 = vmatpush1.msra.mxu0 0.0
    %404 = vmatprep.subr.mxu0 0.0
    %405 = vmatpush1.msra.mxu0 0.0
    %406 = vmatprep.subr.mxu0 0.0
    %407 = vmatpush1.msra.mxu0 0.0
    %408 = vmatprep.subr.mxu0 0.0
    %409 = vmatpush1.msra.mxu0 0.0
    %410 = vmatprep.subr.mxu0 0.0
    %411 = vmatpush1.msra.mxu0 0.0
    %412 = vmatprep.subr.mxu0 0.0
    %413 = vmatpush1.msra.mxu0 0.0
    %414 = vmatprep.subr.mxu0 0.0
    %415 = vmatpush1.msra.mxu0 0.0
    %416 = vmatprep.subr.mxu0 0.0
    %417 = vmatpush1.msra.mxu0 0.0
    %418 = vmatprep.subr.mxu0 0.0
    %419 = vmatpush1.msra.mxu0 0.0
    %420 = vmatprep.subr.mxu0 0.0
    %421 = vmatpush1.msra.mxu0 0.0
    %422 = vmatprep.subr.mxu0 0.0
    %423 = vmatpush1.msra.mxu0 0.0
    %424 = vmatprep.subr.mxu0 0.0
    %425 = vmatpush1.msra.mxu0 0.0
    %426 = vmatprep.subr.mxu0 0.0
    %427 = vmatpush1.msra.mxu0 0.0
    %428 = vmatprep.subr.mxu0 0.0
    %429 = vmatpush1.msra.mxu0 0.0
    %430 = vmatprep.subr.mxu0 0.0
    %431 = vmatpush1.msra.mxu0 0.0
    %432 = vmatprep.subr.mxu0 0.0
    %433 = vmatpush1.msra.mxu0 0.0
    %434 = vmatprep.subr.mxu0 0.0
    %435 = vmatpush1.msra.mxu0 0.0
    %436 = vmatprep.subr.mxu0 0.0
    %437 = vmatpush1.msra.mxu0 0.0
    %438 = vmatprep.subr.mxu0 0.0
    %439 = vmatpush1.msra.mxu0 0.0
    %440 = vmatprep.subr.mxu0 0.0
    %441 = vmatpush1.msra.mxu0 0.0
    %442 = vmatprep.subr.mxu0 0.0
    %443 = vmatpush1.msra.mxu0 0.0
    %444 = vmatprep.mubr.f32.mxu0 0.0
    %445 = vmatmul.mubr.f32.gmra.mrb[0].mxu0 %v369
    %v446 = vpop.f32.mrb[0].mxu0
    %v447 = vadd.f32 0.0, %v446
    %v448 = vpop.f32.mrb[0].mxu0
    %449 = vmatprep.mubr.f32.mxu0 0.0
    %450 = vmatmul.mubr.f32.gmra.mrb[0].mxu0 %v372
    %v451 = vpop.f32.mrb[0].mxu0
    %v452 = vadd.f32 0.0, %v451
    %v453 = vpop.f32.mrb[0].mxu0
    %454 = vmatprep.mubr.f32.mxu0 0.0
    %455 = vmatmul.mubr.f32.gmra.mrb[0].mxu0 %v375
    %v456 = vpop.f32.mrb[0].mxu0
    %v457 = vadd.f32 0.0, %v456
    %v458 = vpop.f32.mrb[0].mxu0
    %459 = vmatprep.mubr.f32.mxu0 0.0
    %460 = vmatmul.mubr.f32.gmra.mrb[0].mxu0 %v378
    %v461 = vpop.f32.mrb[0].mxu0
    %v462 = vadd.f32 0.0, %v461
    %v463 = vpop.f32.mrb[0].mxu0
    %464 = vdwg.mxu0
    %v465 = vadd.f32 %v350, %v447
    %v466 = vadd.f32 %v355, %v452
    %v467 = vadd.f32 %v360, %v457
    %v468 = vadd.f32 %v365, %v462
    %v469 = vld [vmem:[%s4] sm:$0x1]
    %v470 = vlaneseq
    %v471 = vshrl.u32 %v470, 7
    %v472 = vsub.s32 0, %v471
    %v473 = vrot.slane %v469, %v472
    %v474 = vmul.f32 %v465, %v473
    %v475 = vmul.f32 %v466, %v473
    %v476 = vmul.f32 %v467, %v473
    %v477 = vmul.f32 %v468, %v473
    %v478 = vld [vmem:[%s4 + $0x1] sm:$0x1]
    %v479 = vlaneseq
    %v480 = vshrl.u32 %v479, 7
    %v481 = vsub.s32 0, %v480
    %v482 = vrot.slane %v478, %v481
    %v483 = vadd.f32 %v474, %v482
    %v484 = vadd.f32 %v475, %v482
    %v485 = vadd.f32 %v476, %v482
    %v486 = vadd.f32 %v477, %v482
    %vm487 = vcmp.ge.f32.partialorder %v483, 0.0
    %vm488 = vcmp.ge.f32.partialorder %v484, 0.0
    %vm489 = vcmp.ge.f32.partialorder %v485, 0.0
    %vm490 = vcmp.ge.f32.partialorder %v486, 0.0
    %v491 = vmul.f32 %v483, 0.1
    %v492 = vmul.f32 %v484, 0.1
    %v493 = vmul.f32 %v485, 0.1
    %v494 = vmul.f32 %v486, 0.1
    %v495 = vsel %vm487, %v483, %v491
    %v496 = vsel %vm488, %v484, %v492
    %v497 = vsel %vm489, %v485, %v493
    %v498 = vsel %vm490, %v486, %v494
    %v499 = vld [vmem:[%s4 + $0x6] sm:$0x1]
    %v500 = vlaneseq
    %v501 = vshrl.u32 %v500, 7
    %v502 = vsub.s32 0, %v501
    %v503 = vrot.slane %v499, %v502
    %v504 = vmul.f32 %v250, %v503
    %v505 = vmul.f32 %v256, %v503
    %v506 = vmul.f32 %v262, %v503
    %v507 = vmul.f32 %v268, %v503
    %v508 = vld [vmem:[%s4 + $0x7] sm:$0x1]
    %v509 = vlaneseq
    %v510 = vshrl.u32 %v509, 7
    %v511 = vsub.s32 0, %v510
    %v512 = vrot.slane %v508, %v511
    %v513 = vadd.f32 %v504, %v512
    %v514 = vadd.f32 %v505, %v512
    %v515 = vadd.f32 %v506, %v512
    %v516 = vadd.f32 %v507, %v512
    %v517 = vld [vmem:[#allocation2] sm:$0xff]
    %v518 = vld [vmem:[#allocation2 + $0x8] sm:$0xff]
    %v519 = vld [vmem:[#allocation2 + $0x10] sm:$0xff]
    %v520 = vld [vmem:[#allocation2 + $0x18] sm:$0xff]
    %v521 = vld [vmem:[#allocation2 + $0x20] sm:$0xff]
    %v522 = vld [vmem:[#allocation2 + $0x28] sm:$0xff]
    %v523 = vld [vmem:[#allocation2 + $0x30] sm:$0xff]
    %v524 = vld [vmem:[#allocation2 + $0x38] sm:$0xff]
    %v525 = vld [vmem:[#allocation2 + $0x40] sm:$0xff]
    %v526 = vld [vmem:[#allocation2 + $0x48] sm:$0xff]
    %v527 = vld [vmem:[#allocation2 + $0x50] sm:$0xff]
    %v528 = vld [vmem:[#allocation2 + $0x58] sm:$0xff]
    %v529 = vld [vmem:[#allocation2 + $0x60] sm:$0xff]
    %v530 = vld [vmem:[#allocation2 + $0x68] sm:$0xff]
    %v531 = vld [vmem:[#allocation2 + $0x70] sm:$0xff]
    %v532 = vld [vmem:[#allocation2 + $0x78] sm:$0xff]
    %v533 = vld [vmem:[#allocation2 + $0x80] sm:$0xff]
    %v534 = vld [vmem:[#allocation2 + $0x88] sm:$0xff]
    %v535 = vld [vmem:[#allocation2 + $0x90] sm:$0xff]
    %v536 = vld [vmem:[#allocation2 + $0x98] sm:$0xff]
    %v537 = vld [vmem:[#allocation2 + $0xa0] sm:$0xff]
    %v538 = vld [vmem:[#allocation2 + $0xa8] sm:$0xff]
    %v539 = vld [vmem:[#allocation2 + $0xb0] sm:$0xff]
    %v540 = vld [vmem:[#allocation2 + $0xb8] sm:$0xff]
    %v541 = vld [vmem:[#allocation2 + $0xc0] sm:$0xff]
    %v542 = vld [vmem:[#allocation2 + $0xc8] sm:$0xff]
    %v543 = vld [vmem:[#allocation2 + $0xd0] sm:$0xff]
    %v544 = vld [vmem:[#allocation2 + $0xd8] sm:$0xff]
    %v545 = vld [vmem:[#allocation2 + $0xe0] sm:$0xff]
    %v546 = vld [vmem:[#allocation2 + $0xe8] sm:$0xff]
    %v547 = vld [vmem:[#allocation2 + $0xf0] sm:$0xff]
    %v548 = vld [vmem:[#allocation2 + $0xf8] sm:$0xff]
    %v549 = vld [vmem:[#allocation2 + $0x100] sm:$0xff]
    %v550 = vld [vmem:[#allocation2 + $0x108] sm:$0xff]
    %v551 = vld [vmem:[#allocation2 + $0x110] sm:$0xff]
    %v552 = vld [vmem:[#allocation2 + $0x118] sm:$0xff]
    %v553 = vld [vmem:[#allocation2 + $0x120] sm:$0xff]
    %v554 = vld [vmem:[#allocation2 + $0x128] sm:$0xff]
    %v555 = vld [vmem:[#allocation2 + $0x130] sm:$0xff]
    %v556 = vld [vmem:[#allocation2 + $0x138] sm:$0xff]
    %v557 = vld [vmem:[#allocation2 + $0x140] sm:$0xff]
    %v558 = vld [vmem:[#allocation2 + $0x148] sm:$0xff]
    %v559 = vld [vmem:[#allocation2 + $0x150] sm:$0xff]
    %v560 = vld [vmem:[#allocation2 + $0x158] sm:$0xff]
    %v561 = vld [vmem:[#allocation2 + $0x160] sm:$0xff]
    %v562 = vld [vmem:[#allocation2 + $0x168] sm:$0xff]
    %v563 = vld [vmem:[#allocation2 + $0x170] sm:$0xff]
    %v564 = vld [vmem:[#allocation2 + $0x178] sm:$0xff]
    %565 = vmatprep.subr.mxu0 %v518
    %566 = vmatpush1.msra.mxu0 %v517
    %567 = vmatprep.subr.mxu0 %v521
    %568 = vmatpush1.msra.mxu0 %v520
    %569 = vmatprep.subr.mxu0 %v524
    %570 = vmatpush1.msra.mxu0 %v523
    %571 = vmatprep.subr.mxu0 %v527
    %572 = vmatpush1.msra.mxu0 %v526
    %573 = vmatprep.subr.mxu0 %v530
    %574 = vmatpush1.msra.mxu0 %v529
    %575 = vmatprep.subr.mxu0 %v533
    %576 = vmatpush1.msra.mxu0 %v532
    %577 = vmatprep.subr.mxu0 %v536
    %578 = vmatpush1.msra.mxu0 %v535
    %579 = vmatprep.subr.mxu0 %v539
    %580 = vmatpush1.msra.mxu0 %v538
    %581 = vmatprep.subr.mxu0 %v542
    %582 = vmatpush1.msra.mxu0 %v541
    %583 = vmatprep.subr.mxu0 %v545
    %584 = vmatpush1.msra.mxu0 %v544
    %585 = vmatprep.subr.mxu0 %v548
    %586 = vmatpush1.msra.mxu0 %v547
    %587 = vmatprep.subr.mxu0 %v551
    %588 = vmatpush1.msra.mxu0 %v550
    %589 = vmatprep.subr.mxu0 %v554
    %590 = vmatpush1.msra.mxu0 %v553
    %591 = vmatprep.subr.mxu0 %v557
    %592 = vmatpush1.msra.mxu0 %v556
    %593 = vmatprep.subr.mxu0 %v560
    %594 = vmatpush1.msra.mxu0 %v559
    %595 = vmatprep.subr.mxu0 %v563
    %596 = vmatpush1.msra.mxu0 %v562
    %597 = vmatprep.subr.mxu0 0.0
    %598 = vmatpush1.msra.mxu0 0.0
    %599 = vmatprep.subr.mxu0 0.0
    %600 = vmatpush1.msra.mxu0 0.0
    %601 = vmatprep.subr.mxu0 0.0
    %602 = vmatpush1.msra.mxu0 0.0
    %603 = vmatprep.subr.mxu0 0.0
    %604 = vmatpush1.msra.mxu0 0.0
    %605 = vmatprep.subr.mxu0 0.0
    %606 = vmatpush1.msra.mxu0 0.0
    %607 = vmatprep.subr.mxu0 0.0
    %608 = vmatpush1.msra.mxu0 0.0
    %609 = vmatprep.subr.mxu0 0.0
    %610 = vmatpush1.msra.mxu0 0.0
    %611 = vmatprep.subr.mxu0 0.0
    %612 = vmatpush1.msra.mxu0 0.0
    %613 = vmatprep.subr.mxu0 0.0
    %614 = vmatpush1.msra.mxu0 0.0
    %615 = vmatprep.subr.mxu0 0.0
    %616 = vmatpush1.msra.mxu0 0.0
    %617 = vmatprep.subr.mxu0 0.0
    %618 = vmatpush1.msra.mxu0 0.0
    %619 = vmatprep.subr.mxu0 0.0
    %620 = vmatpush1.msra.mxu0 0.0
    %621 = vmatprep.subr.mxu0 0.0
    %622 = vmatpush1.msra.mxu0 0.0
    %623 = vmatprep.subr.mxu0 0.0
    %624 = vmatpush1.msra.mxu0 0.0
    %625 = vmatprep.subr.mxu0 0.0
    %626 = vmatpush1.msra.mxu0 0.0
    %627 = vmatprep.subr.mxu0 0.0
    %628 = vmatpush1.msra.mxu0 0.0
    %629 = vmatprep.mubr.f32.mxu0 0.0
    %630 = vmatmul.mubr.f32.gmra.mrb[0].mxu0 %v495
    %v631 = vpop.f32.mrb[0].mxu0
    %v632 = vadd.f32 0.0, %v631
    %v633 = vpop.f32.mrb[0].mxu0
    %v634 = vadd.f32 0.0, %v633
    %635 = vmatprep.mubr.f32.mxu0 0.0
    %636 = vmatmul.mubr.f32.gmra.mrb[0].mxu0 %v496
    %v637 = vpop.f32.mrb[0].mxu0
    %v638 = vadd.f32 0.0, %v637
    %v639 = vpop.f32.mrb[0].mxu0
    %v640 = vadd.f32 0.0, %v639
    %641 = vmatprep.mubr.f32.mxu0 0.0
    %642 = vmatmul.mubr.f32.gmra.mrb[0].mxu0 %v497
    %v643 = vpop.f32.mrb[0].mxu0
    %v644 = vadd.f32 0.0, %v643
    %v645 = vpop.f32.mrb[0].mxu0
    %v646 = vadd.f32 0.0, %v645
    %647 = vmatprep.mubr.f32.mxu0 0.0
    %648 = vmatmul.mubr.f32.gmra.mrb[0].mxu0 %v498
    %v649 = vpop.f32.mrb[0].mxu0
    %v650 = vadd.f32 0.0, %v649
    %v651 = vpop.f32.mrb[0].mxu0
    %v652 = vadd.f32 0.0, %v651
    %653 = vdwg.mxu0
    %654 = vmatprep.subr.mxu0 0.0
    %655 = vmatpush1.msra.mxu0 %v519
    %656 = vmatprep.subr.mxu0 0.0
    %657 = vmatpush1.msra.mxu0 %v522
    %658 = vmatprep.subr.mxu0 0.0
    %659 = vmatpush1.msra.mxu0 %v525
    %660 = vmatprep.subr.mxu0 0.0
    %661 = vmatpush1.msra.mxu0 %v528
    %662 = vmatprep.subr.mxu0 0.0
    %663 = vmatpush1.msra.mxu0 %v531
    %664 = vmatprep.subr.mxu0 0.0
    %665 = vmatpush1.msra.mxu0 %v534
    %666 = vmatprep.subr.mxu0 0.0
    %667 = vmatpush1.msra.mxu0 %v537
    %668 = vmatprep.subr.mxu0 0.0
    %669 = vmatpush1.msra.mxu0 %v540
    %670 = vmatprep.subr.mxu0 0.0
    %671 = vmatpush1.msra.mxu0 %v543
    %672 = vmatprep.subr.mxu0 0.0
    %673 = vmatpush1.msra.mxu0 %v546
    %674 = vmatprep.subr.mxu0 0.0
    %675 = vmatpush1.msra.mxu0 %v549
    %676 = vmatprep.subr.mxu0 0.0
    %677 = vmatpush1.msra.mxu0 %v552
    %678 = vmatprep.subr.mxu0 0.0
    %679 = vmatpush1.msra.mxu0 %v555
    %680 = vmatprep.subr.mxu0 0.0
    %681 = vmatpush1.msra.mxu0 %v558
    %682 = vmatprep.subr.mxu0 0.0
    %683 = vmatpush1.msra.mxu0 %v561
    %684 = vmatprep.subr.mxu0 0.0
    %685 = vmatpush1.msra.mxu0 %v564
    %686 = vmatprep.subr.mxu0 0.0
    %687 = vmatpush1.msra.mxu0 0.0
    %688 = vmatprep.subr.mxu0 0.0
    %689 = vmatpush1.msra.mxu0 0.0
    %690 = vmatprep.subr.mxu0 0.0
    %691 = vmatpush1.msra.mxu0 0.0
    %692 = vmatprep.subr.mxu0 0.0
    %693 = vmatpush1.msra.mxu0 0.0
    %694 = vmatprep.subr.mxu0 0.0
    %695 = vmatpush1.msra.mxu0 0.0
    %696 = vmatprep.subr.mxu0 0.0
    %697 = vmatpush1.msra.mxu0 0.0
    %698 = vmatprep.subr.mxu0 0.0
    %699 = vmatpush1.msra.mxu0 0.0
    %700 = vmatprep.subr.mxu0 0.0
    %701 = vmatpush1.msra.mxu0 0.0
    %702 = vmatprep.subr.mxu0 0.0
    %703 = vmatpush1.msra.mxu0 0.0
    %704 = vmatprep.subr.mxu0 0.0
    %705 = vmatpush1.msra.mxu0 0.0
    %706 = vmatprep.subr.mxu0 0.0
    %707 = vmatpush1.msra.mxu0 0.0
    %708 = vmatprep.subr.mxu0 0.0
    %709 = vmatpush1.msra.mxu0 0.0
    %710 = vmatprep.subr.mxu0 0.0
    %711 = vmatpush1.msra.mxu0 0.0
    %712 = vmatprep.subr.mxu0 0.0
    %713 = vmatpush1.msra.mxu0 0.0
    %714 = vmatprep.subr.mxu0 0.0
    %715 = vmatpush1.msra.mxu0 0.0
    %716 = vmatprep.subr.mxu0 0.0
    %717 = vmatpush1.msra.mxu0 0.0
    %718 = vmatprep.mubr.f32.mxu0 0.0
    %719 = vmatmul.mubr.f32.gmra.mrb[0].mxu0 %v495
    %v720 = vpop.f32.mrb[0].mxu0
    %v721 = vadd.f32 0.0, %v720
    %v722 = vpop.f32.mrb[0].mxu0
    %723 = vmatprep.mubr.f32.mxu0 0.0
    %724 = vmatmul.mubr.f32.gmra.mrb[0].mxu0 %v496
    %v725 = vpop.f32.mrb[0].mxu0
    %v726 = vadd.f32 0.0, %v725
    %v727 = vpop.f32.mrb[0].mxu0
    %728 = vmatprep.mubr.f32.mxu0 0.0
    %729 = vmatmul.mubr.f32.gmra.mrb[0].mxu0 %v497
    %v730 = vpop.f32.mrb[0].mxu0
    %v731 = vadd.f32 0.0, %v730
    %v732 = vpop.f32.mrb[0].mxu0
    %733 = vmatprep.mubr.f32.mxu0 0.0
    %734 = vmatmul.mubr.f32.gmra.mrb[0].mxu0 %v498
    %v735 = vpop.f32.mrb[0].mxu0
    %v736 = vadd.f32 0.0, %v735
    %v737 = vpop.f32.mrb[0].mxu0
    %738 = vdwg.mxu0
    %739 = vmatprep.subr.mxu0 0.0
    %740 = vmatpush1.msra.mxu0 %v632
    %741 = vmatprep.subr.mxu0 0.0
    %742 = vmatpush1.msra.mxu0 %v638
    %743 = vmatprep.subr.mxu0 0.0
    %744 = vmatpush1.msra.mxu0 %v644
    %745 = vmatprep.subr.mxu0 0.0
    %746 = vmatpush1.msra.mxu0 %v650
    %747 = vmatprep.subr.mxu0 0.0
    %748 = vmatpush1.msra.mxu0 0.0
    %749 = vmatprep.subr.mxu0 0.0
    %750 = vmatpush1.msra.mxu0 0.0
    %751 = vmatprep.subr.mxu0 0.0
    %752 = vmatpush1.msra.mxu0 0.0
    %753 = vmatprep.subr.mxu0 0.0
    %754 = vmatpush1.msra.mxu0 0.0
    %755 = vmatprep.subr.mxu0 0.0
    %756 = vmatpush1.msra.mxu0 0.0
    %757 = vmatprep.subr.mxu0 0.0
    %758 = vmatpush1.msra.mxu0 0.0
    %759 = vmatprep.subr.mxu0 0.0
    %760 = vmatpush1.msra.mxu0 0.0
    %761 = vmatprep.subr.mxu0 0.0
    %762 = vmatpush1.msra.mxu0 0.0
    %763 = vmatprep.subr.mxu0 0.0
    %764 = vmatpush1.msra.mxu0 0.0
    %765 = vmatprep.subr.mxu0 0.0
    %766 = vmatpush1.msra.mxu0 0.0
    %767 = vmatprep.subr.mxu0 0.0
    %768 = vmatpush1.msra.mxu0 0.0
    %769 = vmatprep.subr.mxu0 0.0
    %770 = vmatpush1.msra.mxu0 0.0
    %771 = vmatprep.subr.mxu0 0.0
    %772 = vmatpush1.msra.mxu0 0.0
    %773 = vmatprep.subr.mxu0 0.0
    %774 = vmatpush1.msra.mxu0 0.0
    %775 = vmatprep.subr.mxu0 0.0
    %776 = vmatpush1.msra.mxu0 0.0
    %777 = vmatprep.subr.mxu0 0.0
    %778 = vmatpush1.msra.mxu0 0.0
    %779 = vmatprep.subr.mxu0 0.0
    %780 = vmatpush1.msra.mxu0 0.0
    %781 = vmatprep.subr.mxu0 0.0
    %782 = vmatpush1.msra.mxu0 0.0
    %783 = vmatprep.subr.mxu0 0.0
    %784 = vmatpush1.msra.mxu0 0.0
    %785 = vmatprep.subr.mxu0 0.0
    %786 = vmatpush1.msra.mxu0 0.0
    %787 = vmatprep.subr.mxu0 0.0
    %788 = vmatpush1.msra.mxu0 0.0
    %789 = vmatprep.subr.mxu0 0.0
    %790 = vmatpush1.msra.mxu0 0.0
    %791 = vmatprep.subr.mxu0 0.0
    %792 = vmatpush1.msra.mxu0 0.0
    %793 = vmatprep.subr.mxu0 0.0
    %794 = vmatpush1.msra.mxu0 0.0
    %795 = vmatprep.subr.mxu0 0.0
    %796 = vmatpush1.msra.mxu0 0.0
    %797 = vmatprep.subr.mxu0 0.0
    %798 = vmatpush1.msra.mxu0 0.0
    %799 = vmatprep.subr.mxu0 0.0
    %800 = vmatpush1.msra.mxu0 0.0
    %801 = vmatprep.subr.mxu0 0.0
    %802 = vmatpush1.msra.mxu0 0.0
    %803 = vmatprep.mubr.f32.mxu0 0.0
    %804 = vmatmul.mubr.f32.gmra.mrb[0].mxu0 %v272
    %v805 = vpop.f32.mrb[0].mxu0
    %v806 = vadd.f32 %v634, %v805
    %v807 = vpop.f32.mrb[0].mxu0
    %808 = vmatprep.mubr.f32.mxu0 0.0
    %809 = vmatmul.mubr.f32.gmra.mrb[0].mxu0 %v275
    %v810 = vpop.f32.mrb[0].mxu0
    %v811 = vadd.f32 %v640, %v810
    %v812 = vpop.f32.mrb[0].mxu0
    %813 = vmatprep.mubr.f32.mxu0 0.0
    %814 = vmatmul.mubr.f32.gmra.mrb[0].mxu0 %v278
    %v815 = vpop.f32.mrb[0].mxu0
    %v816 = vadd.f32 %v646, %v815
    %v817 = vpop.f32.mrb[0].mxu0
    %818 = vmatprep.mubr.f32.mxu0 0.0
    %819 = vmatmul.mubr.f32.gmra.mrb[0].mxu0 %v281
    %v820 = vpop.f32.mrb[0].mxu0
    %v821 = vadd.f32 %v652, %v820
    %v822 = vpop.f32.mrb[0].mxu0
    %823 = vdwg.mxu0
    %824 = vmatprep.subr.mxu0 0.0
    %825 = vmatpush1.msra.mxu0 %v721
    %826 = vmatprep.subr.mxu0 0.0
    %827 = vmatpush1.msra.mxu0 %v726
    %828 = vmatprep.subr.mxu0 0.0
    %829 = vmatpush1.msra.mxu0 %v731
    %830 = vmatprep.subr.mxu0 0.0
    %831 = vmatpush1.msra.mxu0 %v736
    %832 = vmatprep.subr.mxu0 0.0
    %833 = vmatpush1.msra.mxu0 0.0
    %834 = vmatprep.subr.mxu0 0.0
    %835 = vmatpush1.msra.mxu0 0.0
    %836 = vmatprep.subr.mxu0 0.0
    %837 = vmatpush1.msra.mxu0 0.0
    %838 = vmatprep.subr.mxu0 0.0
    %839 = vmatpush1.msra.mxu0 0.0
    %840 = vmatprep.subr.mxu0 0.0
    %841 = vmatpush1.msra.mxu0 0.0
    %842 = vmatprep.subr.mxu0 0.0
    %843 = vmatpush1.msra.mxu0 0.0
    %844 = vmatprep.subr.mxu0 0.0
    %845 = vmatpush1.msra.mxu0 0.0
    %846 = vmatprep.subr.mxu0 0.0
    %847 = vmatpush1.msra.mxu0 0.0
    %848 = vmatprep.subr.mxu0 0.0
    %849 = vmatpush1.msra.mxu0 0.0
    %850 = vmatprep.subr.mxu0 0.0
    %851 = vmatpush1.msra.mxu0 0.0
    %852 = vmatprep.subr.mxu0 0.0
    %853 = vmatpush1.msra.mxu0 0.0
    %854 = vmatprep.subr.mxu0 0.0
    %855 = vmatpush1.msra.mxu0 0.0
    %856 = vmatprep.subr.mxu0 0.0
    %857 = vmatpush1.msra.mxu0 0.0
    %858 = vmatprep.subr.mxu0 0.0
    %859 = vmatpush1.msra.mxu0 0.0
    %860 = vmatprep.subr.mxu0 0.0
    %861 = vmatpush1.msra.mxu0 0.0
    %862 = vmatprep.subr.mxu0 0.0
    %863 = vmatpush1.msra.mxu0 0.0
    %864 = vmatprep.subr.mxu0 0.0
    %865 = vmatpush1.msra.mxu0 0.0
    %866 = vmatprep.subr.mxu0 0.0
    %867 = vmatpush1.msra.mxu0 0.0
    %868 = vmatprep.subr.mxu0 0.0
    %869 = vmatpush1.msra.mxu0 0.0
    %870 = vmatprep.subr.mxu0 0.0
    %871 = vmatpush1.msra.mxu0 0.0
    %872 = vmatprep.subr.mxu0 0.0
    %873 = vmatpush1.msra.mxu0 0.0
    %874 = vmatprep.subr.mxu0 0.0
    %875 = vmatpush1.msra.mxu0 0.0
    %876 = vmatprep.subr.mxu0 0.0
    %877 = vmatpush1.msra.mxu0 0.0
    %878 = vmatprep.subr.mxu0 0.0
    %879 = vmatpush1.msra.mxu0 0.0
    %880 = vmatprep.subr.mxu0 0.0
    %881 = vmatpush1.msra.mxu0 0.0
    %882 = vmatprep.subr.mxu0 0.0
    %883 = vmatpush1.msra.mxu0 0.0
    %884 = vmatprep.subr.mxu0 0.0
    %885 = vmatpush1.msra.mxu0 0.0
    %886 = vmatprep.subr.mxu0 0.0
    %887 = vmatpush1.msra.mxu0 0.0
    %888 = vmatprep.mubr.f32.mxu0 0.0
    %889 = vmatmul.mubr.f32.gmra.mrb[0].mxu0 %v369
    %v890 = vpop.f32.mrb[0].mxu0
    %v891 = vadd.f32 0.0, %v890
    %v892 = vpop.f32.mrb[0].mxu0
    %893 = vmatprep.mubr.f32.mxu0 0.0
    %894 = vmatmul.mubr.f32.gmra.mrb[0].mxu0 %v372
    %v895 = vpop.f32.mrb[0].mxu0
    %v896 = vadd.f32 0.0, %v895
    %v897 = vpop.f32.mrb[0].mxu0
    %898 = vmatprep.mubr.f32.mxu0 0.0
    %899 = vmatmul.mubr.f32.gmra.mrb[0].mxu0 %v375
    %v900 = vpop.f32.mrb[0].mxu0
    %v901 = vadd.f32 0.0, %v900
    %v902 = vpop.f32.mrb[0].mxu0
    %903 = vmatprep.mubr.f32.mxu0 0.0
    %904 = vmatmul.mubr.f32.gmra.mrb[0].mxu0 %v378
    %v905 = vpop.f32.mrb[0].mxu0
    %v906 = vadd.f32 0.0, %v905
    %v907 = vpop.f32.mrb[0].mxu0
    %908 = vdwg.mxu0
    %v909 = vadd.f32 %v806, %v891
    %v910 = vadd.f32 %v811, %v896
    %v911 = vadd.f32 %v816, %v901
    %v912 = vadd.f32 %v821, %v906
    %v913 = vld [vmem:[%s4 + $0x2] sm:$0x1]
    %v914 = vlaneseq
    %v915 = vshrl.u32 %v914, 7
    %v916 = vsub.s32 0, %v915
    %v917 = vrot.slane %v913, %v916
    %v918 = vmul.f32 %v909, %v917
    %v919 = vmul.f32 %v910, %v917
    %v920 = vmul.f32 %v911, %v917
    %v921 = vmul.f32 %v912, %v917
    %v922 = vld [vmem:[%s4 + $0x3] sm:$0x1]
    %v923 = vlaneseq
    %v924 = vshrl.u32 %v923, 7
    %v925 = vsub.s32 0, %v924
    %v926 = vrot.slane %v922, %v925
    %v927 = vadd.f32 %v918, %v926
    %v928 = vadd.f32 %v919, %v926
    %v929 = vadd.f32 %v920, %v926
    %v930 = vadd.f32 %v921, %v926
    %vm931 = vcmp.ge.f32.partialorder %v927, 0.0
    %vm932 = vcmp.ge.f32.partialorder %v928, 0.0
    %vm933 = vcmp.ge.f32.partialorder %v929, 0.0
    %vm934 = vcmp.ge.f32.partialorder %v930, 0.0
    %v935 = vmul.f32 %v927, 0.1
    %v936 = vmul.f32 %v928, 0.1
    %v937 = vmul.f32 %v929, 0.1
    %v938 = vmul.f32 %v930, 0.1
    %v939 = vsel %vm931, %v927, %v935
    %v940 = vsel %vm932, %v928, %v936
    %v941 = vsel %vm933, %v929, %v937
    %v942 = vsel %vm934, %v930, %v938
    %s943 = scalar_lea.vmem [#allocation2], 384
    %v944 = vld [vmem:[%s943] sm:$0xff]
    %v945 = vld [vmem:[%s943 + $0x8] sm:$0xff]
    %v946 = vld [vmem:[%s943 + $0x10] sm:$0xff]
    %v947 = vld [vmem:[%s943 + $0x18] sm:$0xff]
    %v948 = vld [vmem:[%s943 + $0x20] sm:$0xff]
    %v949 = vld [vmem:[%s943 + $0x28] sm:$0xff]
    %v950 = vld [vmem:[%s943 + $0x30] sm:$0xff]
    %v951 = vld [vmem:[%s943 + $0x38] sm:$0xff]
    %v952 = vld [vmem:[%s943 + $0x40] sm:$0xff]
    %v953 = vld [vmem:[%s943 + $0x48] sm:$0xff]
    %v954 = vld [vmem:[%s943 + $0x50] sm:$0xff]
    %v955 = vld [vmem:[%s943 + $0x58] sm:$0xff]
    %v956 = vld [vmem:[%s943 + $0x60] sm:$0xff]
    %v957 = vld [vmem:[%s943 + $0x68] sm:$0xff]
    %v958 = vld [vmem:[%s943 + $0x70] sm:$0xff]
    %v959 = vld [vmem:[%s943 + $0x78] sm:$0xff]
    %v960 = vld [vmem:[%s943 + $0x80] sm:$0xff]
    %v961 = vld [vmem:[%s943 + $0x88] sm:$0xff]
    %v962 = vld [vmem:[%s943 + $0x90] sm:$0xff]
    %v963 = vld [vmem:[%s943 + $0x98] sm:$0xff]
    %v964 = vld [vmem:[%s943 + $0xa0] sm:$0xff]
    %v965 = vld [vmem:[%s943 + $0xa8] sm:$0xff]
    %v966 = vld [vmem:[%s943 + $0xb0] sm:$0xff]
    %v967 = vld [vmem:[%s943 + $0xb8] sm:$0xff]
    %v968 = vld [vmem:[%s943 + $0xc0] sm:$0xff]
    %v969 = vld [vmem:[%s943 + $0xc8] sm:$0xff]
    %v970 = vld [vmem:[%s943 + $0xd0] sm:$0xff]
    %v971 = vld [vmem:[%s943 + $0xd8] sm:$0xff]
    %v972 = vld [vmem:[%s943 + $0xe0] sm:$0xff]
    %v973 = vld [vmem:[%s943 + $0xe8] sm:$0xff]
    %v974 = vld [vmem:[%s943 + $0xf0] sm:$0xff]
    %v975 = vld [vmem:[%s943 + $0xf8] sm:$0xff]
    %v976 = vld [vmem:[%s943 + $0x100] sm:$0xff]
    %v977 = vld [vmem:[%s943 + $0x108] sm:$0xff]
    %v978 = vld [vmem:[%s943 + $0x110] sm:$0xff]
    %v979 = vld [vmem:[%s943 + $0x118] sm:$0xff]
    %v980 = vld [vmem:[%s943 + $0x120] sm:$0xff]
    %v981 = vld [vmem:[%s943 + $0x128] sm:$0xff]
    %v982 = vld [vmem:[%s943 + $0x130] sm:$0xff]
    %v983 = vld [vmem:[%s943 + $0x138] sm:$0xff]
    %v984 = vld [vmem:[%s943 + $0x140] sm:$0xff]
    %v985 = vld [vmem:[%s943 + $0x148] sm:$0xff]
    %v986 = vld [vmem:[%s943 + $0x150] sm:$0xff]
    %v987 = vld [vmem:[%s943 + $0x158] sm:$0xff]
    %v988 = vld [vmem:[%s943 + $0x160] sm:$0xff]
    %v989 = vld [vmem:[%s943 + $0x168] sm:$0xff]
    %v990 = vld [vmem:[%s943 + $0x170] sm:$0xff]
    %v991 = vld [vmem:[%s943 + $0x178] sm:$0xff]
    %992 = vmatprep.subr.mxu0 %v945
    %993 = vmatpush1.msra.mxu0 %v944
    %994 = vmatprep.subr.mxu0 %v948
    %995 = vmatpush1.msra.mxu0 %v947
    %996 = vmatprep.subr.mxu0 %v951
    %997 = vmatpush1.msra.mxu0 %v950
    %998 = vmatprep.subr.mxu0 %v954
    %999 = vmatpush1.msra.mxu0 %v953
    %1000 = vmatprep.subr.mxu0 %v957
    %1001 = vmatpush1.msra.mxu0 %v956
    %1002 = vmatprep.subr.mxu0 %v960
    %1003 = vmatpush1.msra.mxu0 %v959
    %1004 = vmatprep.subr.mxu0 %v963
    %1005 = vmatpush1.msra.mxu0 %v962
    %1006 = vmatprep.subr.mxu0 %v966
    %1007 = vmatpush1.msra.mxu0 %v965
    %1008 = vmatprep.subr.mxu0 %v969
    %1009 = vmatpush1.msra.mxu0 %v968
    %1010 = vmatprep.subr.mxu0 %v972
    %1011 = vmatpush1.msra.mxu0 %v971
    %1012 = vmatprep.subr.mxu0 %v975
    %1013 = vmatpush1.msra.mxu0 %v974
    %1014 = vmatprep.subr.mxu0 %v978
    %1015 = vmatpush1.msra.mxu0 %v977
    %1016 = vmatprep.subr.mxu0 %v981
    %1017 = vmatpush1.msra.mxu0 %v980
    %1018 = vmatprep.subr.mxu0 %v984
    %1019 = vmatpush1.msra.mxu0 %v983
    %1020 = vmatprep.subr.mxu0 %v987
    %1021 = vmatpush1.msra.mxu0 %v986
    %1022 = vmatprep.subr.mxu0 %v990
    %1023 = vmatpush1.msra.mxu0 %v989
    %1024 = vmatprep.subr.mxu0 0.0
    %1025 = vmatpush1.msra.mxu0 0.0
    %1026 = vmatprep.subr.mxu0 0.0
    %1027 = vmatpush1.msra.mxu0 0.0
    %1028 = vmatprep.subr.mxu0 0.0
    %1029 = vmatpush1.msra.mxu0 0.0
    %1030 = vmatprep.subr.mxu0 0.0
    %1031 = vmatpush1.msra.mxu0 0.0
    %1032 = vmatprep.subr.mxu0 0.0
    %1033 = vmatpush1.msra.mxu0 0.0
    %1034 = vmatprep.subr.mxu0 0.0
    %1035 = vmatpush1.msra.mxu0 0.0
    %1036 = vmatprep.subr.mxu0 0.0
    %1037 = vmatpush1.msra.mxu0 0.0
    %1038 = vmatprep.subr.mxu0 0.0
    %1039 = vmatpush1.msra.mxu0 0.0
    %1040 = vmatprep.subr.mxu0 0.0
    %1041 = vmatpush1.msra.mxu0 0.0
    %1042 = vmatprep.subr.mxu0 0.0
    %1043 = vmatpush1.msra.mxu0 0.0
    %1044 = vmatprep.subr.mxu0 0.0
    %1045 = vmatpush1.msra.mxu0 0.0
    %1046 = vmatprep.subr.mxu0 0.0
    %1047 = vmatpush1.msra.mxu0 0.0
    %1048 = vmatprep.subr.mxu0 0.0
    %1049 = vmatpush1.msra.mxu0 0.0
    %1050 = vmatprep.subr.mxu0 0.0
    %1051 = vmatpush1.msra.mxu0 0.0
    %1052 = vmatprep.subr.mxu0 0.0
    %1053 = vmatpush1.msra.mxu0 0.0
    %1054 = vmatprep.subr.mxu0 0.0
    %1055 = vmatpush1.msra.mxu0 0.0
    %1056 = vmatprep.mubr.f32.mxu0 0.0
    %1057 = vmatmul.mubr.f32.gmra.mrb[0].mxu0 %v939
    %v1058 = vpop.f32.mrb[0].mxu0
    %v1059 = vadd.f32 0.0, %v1058
    %v1060 = vpop.f32.mrb[0].mxu0
    %v1061 = vadd.f32 0.0, %v1060
    %1062 = vmatprep.mubr.f32.mxu0 0.0
    %1063 = vmatmul.mubr.f32.gmra.mrb[0].mxu0 %v940
    %v1064 = vpop.f32.mrb[0].mxu0
    %v1065 = vadd.f32 0.0, %v1064
    %v1066 = vpop.f32.mrb[0].mxu0
    %v1067 = vadd.f32 0.0, %v1066
    %1068 = vmatprep.mubr.f32.mxu0 0.0
    %1069 = vmatmul.mubr.f32.gmra.mrb[0].mxu0 %v941
    %v1070 = vpop.f32.mrb[0].mxu0
    %v1071 = vadd.f32 0.0, %v1070
    %v1072 = vpop.f32.mrb[0].mxu0
    %v1073 = vadd.f32 0.0, %v1072
    %1074 = vmatprep.mubr.f32.mxu0 0.0
    %1075 = vmatmul.mubr.f32.gmra.mrb[0].mxu0 %v942
    %v1076 = vpop.f32.mrb[0].mxu0
    %v1077 = vadd.f32 0.0, %v1076
    %v1078 = vpop.f32.mrb[0].mxu0
    %v1079 = vadd.f32 0.0, %v1078
    %1080 = vdwg.mxu0
    %1081 = vmatprep.subr.mxu0 0.0
    %1082 = vmatpush1.msra.mxu0 %v946
    %1083 = vmatprep.subr.mxu0 0.0
    %1084 = vmatpush1.msra.mxu0 %v949
    %1085 = vmatprep.subr.mxu0 0.0
    %1086 = vmatpush1.msra.mxu0 %v952
    %1087 = vmatprep.subr.mxu0 0.0
    %1088 = vmatpush1.msra.mxu0 %v955
    %1089 = vmatprep.subr.mxu0 0.0
    %1090 = vmatpush1.msra.mxu0 %v958
    %1091 = vmatprep.subr.mxu0 0.0
    %1092 = vmatpush1.msra.mxu0 %v961
    %1093 = vmatprep.subr.mxu0 0.0
    %1094 = vmatpush1.msra.mxu0 %v964
    %1095 = vmatprep.subr.mxu0 0.0
    %1096 = vmatpush1.msra.mxu0 %v967
    %1097 = vmatprep.subr.mxu0 0.0
    %1098 = vmatpush1.msra.mxu0 %v970
    %1099 = vmatprep.subr.mxu0 0.0
    %1100 = vmatpush1.msra.mxu0 %v973
    %1101 = vmatprep.subr.mxu0 0.0
    %1102 = vmatpush1.msra.mxu0 %v976
    %1103 = vmatprep.subr.mxu0 0.0
    %1104 = vmatpush1.msra.mxu0 %v979
    %1105 = vmatprep.subr.mxu0 0.0
    %1106 = vmatpush1.msra.mxu0 %v982
    %1107 = vmatprep.subr.mxu0 0.0
    %1108 = vmatpush1.msra.mxu0 %v985
    %1109 = vmatprep.subr.mxu0 0.0
    %1110 = vmatpush1.msra.mxu0 %v988
    %1111 = vmatprep.subr.mxu0 0.0
    %1112 = vmatpush1.msra.mxu0 %v991
    %1113 = vmatprep.subr.mxu0 0.0
    %1114 = vmatpush1.msra.mxu0 0.0
    %1115 = vmatprep.subr.mxu0 0.0
    %1116 = vmatpush1.msra.mxu0 0.0
    %1117 = vmatprep.subr.mxu0 0.0
    %1118 = vmatpush1.msra.mxu0 0.0
    %1119 = vmatprep.subr.mxu0 0.0
    %1120 = vmatpush1.msra.mxu0 0.0
    %1121 = vmatprep.subr.mxu0 0.0
    %1122 = vmatpush1.msra.mxu0 0.0
    %1123 = vmatprep.subr.mxu0 0.0
    %1124 = vmatpush1.msra.mxu0 0.0
    %1125 = vmatprep.subr.mxu0 0.0
    %1126 = vmatpush1.msra.mxu0 0.0
    %1127 = vmatprep.subr.mxu0 0.0
    %1128 = vmatpush1.msra.mxu0 0.0
    %1129 = vmatprep.subr.mxu0 0.0
    %1130 = vmatpush1.msra.mxu0 0.0
    %1131 = vmatprep.subr.mxu0 0.0
    %1132 = vmatpush1.msra.mxu0 0.0
    %1133 = vmatprep.subr.mxu0 0.0
    %1134 = vmatpush1.msra.mxu0 0.0
    %1135 = vmatprep.subr.mxu0 0.0
    %1136 = vmatpush1.msra.mxu0 0.0
    %1137 = vmatprep.subr.mxu0 0.0
    %1138 = vmatpush1.msra.mxu0 0.0
    %1139 = vmatprep.subr.mxu0 0.0
    %1140 = vmatpush1.msra.mxu0 0.0
    %1141 = vmatprep.subr.mxu0 0.0
    %1142 = vmatpush1.msra.mxu0 0.0
    %1143 = vmatprep.subr.mxu0 0.0
    %1144 = vmatpush1.msra.mxu0 0.0
    %1145 = vmatprep.mubr.f32.mxu0 0.0
    %1146 = vmatmul.mubr.f32.gmra.mrb[0].mxu0 %v939
    %v1147 = vpop.f32.mrb[0].mxu0
    %v1148 = vadd.f32 0.0, %v1147
    %v1149 = vpop.f32.mrb[0].mxu0
    %1150 = vmatprep.mubr.f32.mxu0 0.0
    %1151 = vmatmul.mubr.f32.gmra.mrb[0].mxu0 %v940
    %v1152 = vpop.f32.mrb[0].mxu0
    %v1153 = vadd.f32 0.0, %v1152
    %v1154 = vpop.f32.mrb[0].mxu0
    %1155 = vmatprep.mubr.f32.mxu0 0.0
    %1156 = vmatmul.mubr.f32.gmra.mrb[0].mxu0 %v941
    %v1157 = vpop.f32.mrb[0].mxu0
    %v1158 = vadd.f32 0.0, %v1157
    %v1159 = vpop.f32.mrb[0].mxu0
    %1160 = vmatprep.mubr.f32.mxu0 0.0
    %1161 = vmatmul.mubr.f32.gmra.mrb[0].mxu0 %v942
    %v1162 = vpop.f32.mrb[0].mxu0
    %v1163 = vadd.f32 0.0, %v1162
    %v1164 = vpop.f32.mrb[0].mxu0
    %1165 = vdwg.mxu0
    %1166 = vmatprep.subr.mxu0 0.0
    %1167 = vmatpush1.msra.mxu0 %v1059
    %1168 = vmatprep.subr.mxu0 0.0
    %1169 = vmatpush1.msra.mxu0 %v1065
    %1170 = vmatprep.subr.mxu0 0.0
    %1171 = vmatpush1.msra.mxu0 %v1071
    %1172 = vmatprep.subr.mxu0 0.0
    %1173 = vmatpush1.msra.mxu0 %v1077
    %1174 = vmatprep.subr.mxu0 0.0
    %1175 = vmatpush1.msra.mxu0 0.0
    %1176 = vmatprep.subr.mxu0 0.0
    %1177 = vmatpush1.msra.mxu0 0.0
    %1178 = vmatprep.subr.mxu0 0.0
    %1179 = vmatpush1.msra.mxu0 0.0
    %1180 = vmatprep.subr.mxu0 0.0
    %1181 = vmatpush1.msra.mxu0 0.0
    %1182 = vmatprep.subr.mxu0 0.0
    %1183 = vmatpush1.msra.mxu0 0.0
    %1184 = vmatprep.subr.mxu0 0.0
    %1185 = vmatpush1.msra.mxu0 0.0
    %1186 = vmatprep.subr.mxu0 0.0
    %1187 = vmatpush1.msra.mxu0 0.0
    %1188 = vmatprep.subr.mxu0 0.0
    %1189 = vmatpush1.msra.mxu0 0.0
    %1190 = vmatprep.subr.mxu0 0.0
    %1191 = vmatpush1.msra.mxu0 0.0
    %1192 = vmatprep.subr.mxu0 0.0
    %1193 = vmatpush1.msra.mxu0 0.0
    %1194 = vmatprep.subr.mxu0 0.0
    %1195 = vmatpush1.msra.mxu0 0.0
    %1196 = vmatprep.subr.mxu0 0.0
    %1197 = vmatpush1.msra.mxu0 0.0
    %1198 = vmatprep.subr.mxu0 0.0
    %1199 = vmatpush1.msra.mxu0 0.0
    %1200 = vmatprep.subr.mxu0 0.0
    %1201 = vmatpush1.msra.mxu0 0.0
    %1202 = vmatprep.subr.mxu0 0.0
    %1203 = vmatpush1.msra.mxu0 0.0
    %1204 = vmatprep.subr.mxu0 0.0
    %1205 = vmatpush1.msra.mxu0 0.0
    %1206 = vmatprep.subr.mxu0 0.0
    %1207 = vmatpush1.msra.mxu0 0.0
    %1208 = vmatprep.subr.mxu0 0.0
    %1209 = vmatpush1.msra.mxu0 0.0
    %1210 = vmatprep.subr.mxu0 0.0
    %1211 = vmatpush1.msra.mxu0 0.0
    %1212 = vmatprep.subr.mxu0 0.0
    %1213 = vmatpush1.msra.mxu0 0.0
    %1214 = vmatprep.subr.mxu0 0.0
    %1215 = vmatpush1.msra.mxu0 0.0
    %1216 = vmatprep.subr.mxu0 0.0
    %1217 = vmatpush1.msra.mxu0 0.0
    %1218 = vmatprep.subr.mxu0 0.0
    %1219 = vmatpush1.msra.mxu0 0.0
    %1220 = vmatprep.subr.mxu0 0.0
    %1221 = vmatpush1.msra.mxu0 0.0
    %1222 = vmatprep.subr.mxu0 0.0
    %1223 = vmatpush1.msra.mxu0 0.0
    %1224 = vmatprep.subr.mxu0 0.0
    %1225 = vmatpush1.msra.mxu0 0.0
    %1226 = vmatprep.subr.mxu0 0.0
    %1227 = vmatpush1.msra.mxu0 0.0
    %1228 = vmatprep.subr.mxu0 0.0
    %1229 = vmatpush1.msra.mxu0 0.0
    %1230 = vmatprep.mubr.f32.mxu0 0.0
    %1231 = vmatmul.mubr.f32.gmra.mrb[0].mxu0 %v272
    %v1232 = vpop.f32.mrb[0].mxu0
    %v1233 = vadd.f32 %v1061, %v1232
    %v1234 = vpop.f32.mrb[0].mxu0
    %1235 = vmatprep.mubr.f32.mxu0 0.0
    %1236 = vmatmul.mubr.f32.gmra.mrb[0].mxu0 %v275
    %v1237 = vpop.f32.mrb[0].mxu0
    %v1238 = vadd.f32 %v1067, %v1237
    %v1239 = vpop.f32.mrb[0].mxu0
    %1240 = vmatprep.mubr.f32.mxu0 0.0
    %1241 = vmatmul.mubr.f32.gmra.mrb[0].mxu0 %v278
    %v1242 = vpop.f32.mrb[0].mxu0
    %v1243 = vadd.f32 %v1073, %v1242
    %v1244 = vpop.f32.mrb[0].mxu0
    %1245 = vmatprep.mubr.f32.mxu0 0.0
    %1246 = vmatmul.mubr.f32.gmra.mrb[0].mxu0 %v281
    %v1247 = vpop.f32.mrb[0].mxu0
    %v1248 = vadd.f32 %v1079, %v1247
    %v1249 = vpop.f32.mrb[0].mxu0
    %1250 = vdwg.mxu0
    %1251 = vmatprep.subr.mxu0 0.0
    %1252 = vmatpush1.msra.mxu0 %v1148
    %1253 = vmatprep.subr.mxu0 0.0
    %1254 = vmatpush1.msra.mxu0 %v1153
    %1255 = vmatprep.subr.mxu0 0.0
    %1256 = vmatpush1.msra.mxu0 %v1158
    %1257 = vmatprep.subr.mxu0 0.0
    %1258 = vmatpush1.msra.mxu0 %v1163
    %1259 = vmatprep.subr.mxu0 0.0
    %1260 = vmatpush1.msra.mxu0 0.0
    %1261 = vmatprep.subr.mxu0 0.0
    %1262 = vmatpush1.msra.mxu0 0.0
    %1263 = vmatprep.subr.mxu0 0.0
    %1264 = vmatpush1.msra.mxu0 0.0
    %1265 = vmatprep.subr.mxu0 0.0
    %1266 = vmatpush1.msra.mxu0 0.0
    %1267 = vmatprep.subr.mxu0 0.0
    %1268 = vmatpush1.msra.mxu0 0.0
    %1269 = vmatprep.subr.mxu0 0.0
    %1270 = vmatpush1.msra.mxu0 0.0
    %1271 = vmatprep.subr.mxu0 0.0
    %1272 = vmatpush1.msra.mxu0 0.0
    %1273 = vmatprep.subr.mxu0 0.0
    %1274 = vmatpush1.msra.mxu0 0.0
    %1275 = vmatprep.subr.mxu0 0.0
    %1276 = vmatpush1.msra.mxu0 0.0
    %1277 = vmatprep.subr.mxu0 0.0
    %1278 = vmatpush1.msra.mxu0 0.0
    %1279 = vmatprep.subr.mxu0 0.0
    %1280 = vmatpush1.msra.mxu0 0.0
    %1281 = vmatprep.subr.mxu0 0.0
    %1282 = vmatpush1.msra.mxu0 0.0
    %1283 = vmatprep.subr.mxu0 0.0
    %1284 = vmatpush1.msra.mxu0 0.0
    %1285 = vmatprep.subr.mxu0 0.0
    %1286 = vmatpush1.msra.mxu0 0.0
    %1287 = vmatprep.subr.mxu0 0.0
    %1288 = vmatpush1.msra.mxu0 0.0
    %1289 = vmatprep.subr.mxu0 0.0
    %1290 = vmatpush1.msra.mxu0 0.0
    %1291 = vmatprep.subr.mxu0 0.0
    %1292 = vmatpush1.msra.mxu0 0.0
    %1293 = vmatprep.subr.mxu0 0.0
    %1294 = vmatpush1.msra.mxu0 0.0
    %1295 = vmatprep.subr.mxu0 0.0
    %1296 = vmatpush1.msra.mxu0 0.0
    %1297 = vmatprep.subr.mxu0 0.0
    %1298 = vmatpush1.msra.mxu0 0.0
    %1299 = vmatprep.subr.mxu0 0.0
    %1300 = vmatpush1.msra.mxu0 0.0
    %1301 = vmatprep.subr.mxu0 0.0
    %1302 = vmatpush1.msra.mxu0 0.0
    %1303 = vmatprep.subr.mxu0 0.0
    %1304 = vmatpush1.msra.mxu0 0.0
    %1305 = vmatprep.subr.mxu0 0.0
    %1306 = vmatpush1.msra.mxu0 0.0
    %1307 = vmatprep.subr.mxu0 0.0
    %1308 = vmatpush1.msra.mxu0 0.0
    %1309 = vmatprep.subr.mxu0 0.0
    %1310 = vmatpush1.msra.mxu0 0.0
    %1311 = vmatprep.subr.mxu0 0.0
    %1312 = vmatpush1.msra.mxu0 0.0
    %1313 = vmatprep.subr.mxu0 0.0
    %1314 = vmatpush1.msra.mxu0 0.0
    %1315 = vmatprep.mubr.f32.mxu0 0.0
    %1316 = vmatmul.mubr.f32.gmra.mrb[0].mxu0 %v369
    %v1317 = vpop.f32.mrb[0].mxu0
    %v1318 = vadd.f32 0.0, %v1317
    %v1319 = vpop.f32.mrb[0].mxu0
    %1320 = vmatprep.mubr.f32.mxu0 0.0
    %1321 = vmatmul.mubr.f32.gmra.mrb[0].mxu0 %v372
    %v1322 = vpop.f32.mrb[0].mxu0
    %v1323 = vadd.f32 0.0, %v1322
    %v1324 = vpop.f32.mrb[0].mxu0
    %1325 = vmatprep.mubr.f32.mxu0 0.0
    %1326 = vmatmul.mubr.f32.gmra.mrb[0].mxu0 %v375
    %v1327 = vpop.f32.mrb[0].mxu0
    %v1328 = vadd.f32 0.0, %v1327
    %v1329 = vpop.f32.mrb[0].mxu0
    %1330 = vmatprep.mubr.f32.mxu0 0.0
    %1331 = vmatmul.mubr.f32.gmra.mrb[0].mxu0 %v378
    %v1332 = vpop.f32.mrb[0].mxu0
    %v1333 = vadd.f32 0.0, %v1332
    %v1334 = vpop.f32.mrb[0].mxu0
    %1335 = vdwg.mxu0
    %v1336 = vadd.f32 %v1233, %v1318
    %v1337 = vadd.f32 %v1238, %v1323
    %v1338 = vadd.f32 %v1243, %v1328
    %v1339 = vadd.f32 %v1248, %v1333
    %v1340 = vld [vmem:[%s4 + $0x4] sm:$0x1]
    %v1341 = vlaneseq
    %v1342 = vshrl.u32 %v1341, 7
    %v1343 = vsub.s32 0, %v1342
    %v1344 = vrot.slane %v1340, %v1343
    %v1345 = vmul.f32 %v1336, %v1344
    %v1346 = vmul.f32 %v1337, %v1344
    %v1347 = vmul.f32 %v1338, %v1344
    %v1348 = vmul.f32 %v1339, %v1344
    %v1349 = vld [vmem:[%s4 + $0x5] sm:$0x1]
    %v1350 = vlaneseq
    %v1351 = vshrl.u32 %v1350, 7
    %v1352 = vsub.s32 0, %v1351
    %v1353 = vrot.slane %v1349, %v1352
    %v1354 = vadd.f32 %v1345, %v1353
    %v1355 = vadd.f32 %v1346, %v1353
    %v1356 = vadd.f32 %v1347, %v1353
    %v1357 = vadd.f32 %v1348, %v1353
    %v1358 = vadd.f32 %v1354, %v513
    %v1359 = vadd.f32 %v1355, %v514
    %v1360 = vadd.f32 %v1356, %v515
    %v1361 = vadd.f32 %v1357, %v516
    %1362 = vst [vmem:[%s5] sm:$0xff] %v1358
    %1363 = vst [vmem:[%s5 + $0x8] sm:$0xff] %v1359
    %1364 = vst [vmem:[%s5 + $0x10] sm:$0xff] %v1360
    %1365 = vst [vmem:[%s5 + $0x18] sm:$0xff] %v1361
    // Predicated region
    $region26: #{basic_block_rn12_forward.1} parent=1 // pred_check
      _
    $region27: #{basic_block_rn12_forward.1} parent=1 // pred_check_branch
      %1367 = sbr.rel (0) target = $region29
    $region28: #{basic_block_rn12_forward.1} parent=1 // pred_region
      _
    $region29: #{basic_block_rn12_forward.1} parent=1 // pred_fallthru
      _
    // Predicated region
    $region30: #{basic_block_rn12_forward.1} parent=1 // pred_check
      _
    $region31: #{basic_block_rn12_forward.1} parent=1 // pred_check_branch
      %1369 = sbr.rel (0) target = $region33
    $region32: #{basic_block_rn12_forward.1} parent=1 // pred_region
      _
    $region33: #{basic_block_rn12_forward.1} parent=1 // pred_fallthru
      _
    %1370 = vsyncpa [#allocation3], 1

</llo_original>
